<compile_context>
chip_gen: v5e
topology: v5e:2x2
jax: 0.10.0
libtpu: 0.0.40
codegen_flags: <defaults>
</compile_context>

<pallas_src>
import math
import functools

import jax
import jax.numpy as jnp
from jax.experimental import pallas as pl
from jax.experimental.pallas import tpu as pltpu

LN_EPS = 1e-5                       # PhoBERT / RoBERTa layer_norm_eps
VMEM_LIMIT = 32 * 1024 * 1024       # safe scoped-VMEM limit on v5e/v6e/v7x


def _tile_m(dim, nominal):
    """Largest tile <= nominal that divides dim (multiple of 8 when possible);
    avoids the old 'fall back to the full dimension' VMEM hazard."""
    if dim <= nominal:
        return dim
    for t in range(nominal, 7, -1):
        if dim % t == 0 and t % 8 == 0:
            return t
    return dim   # TODO(synk): pad M instead for pathological non-divisible M


# ----------------------------- Pallas kernels ------------------------------

def _layernorm_kernel(x_ref, g_ref, b_ref, o_ref):
    x = x_ref[...].astype(jnp.float32)
    mu = jnp.mean(x, axis=-1, keepdims=True)
    var = jnp.mean((x - mu) ** 2, axis=-1, keepdims=True)
    y = (x - mu) * jax.lax.rsqrt(var + LN_EPS)
    o_ref[...] = (y * g_ref[...] + b_ref[...]).astype(o_ref.dtype)


def _qkv_proj_kernel(x_ref, w_ref, b_ref, q_ref, k_ref, v_ref):
    """Fused QKV projection; weight (3, H, H) resident in VMEM, three outputs
    written directly in (M, H) layout (no head split/transpose needed later)."""
    x = x_ref[...]
    q_ref[...] = (jnp.dot(x, w_ref[0], preferred_element_type=jnp.float32)
                  + b_ref[0]).astype(q_ref.dtype)
    k_ref[...] = (jnp.dot(x, w_ref[1], preferred_element_type=jnp.float32)
                  + b_ref[1]).astype(k_ref.dtype)
    v_ref[...] = (jnp.dot(x, w_ref[2], preferred_element_type=jnp.float32)
                  + b_ref[2]).astype(v_ref.dtype)


def _attention_kernel(bias_ref, q_ref, k_ref, v_ref, o_ref, *, nh, dh, scale):
    """All heads of one (batch, q-tile) block, full-S keys -> single softmax.
    Grid = (B, S // tq); no cross-step state, both axes 'parallel'."""
    bias = bias_ref[0]                      # (1, S) additive padding bias (f32)
    q_all = q_ref[0]                        # (tq, H) bf16, lane-dense load
    k_all = k_ref[0]                        # (S,  H)
    v_all = v_ref[0]                        # (S,  H)

    outs = []
    for h in range(nh):                     # static unroll over heads
        lo = h * dh
        q = q_all[:, lo:lo + dh]            # (tq, dh)  in-VMEM value slice
        k = k_all[:, lo:lo + dh]            # (S,  dh)
        v = v_all[:, lo:lo + dh]            # (S,  dh)
        s = jax.lax.dot_general(q, k, (((1,), (1,)), ((), ())),
                                preferred_element_type=jnp.float32)  # (tq, S)
        s = s * scale + bias
        m = jnp.max(s, axis=-1, keepdims=True)
        p = jnp.exp(s - m)
        inv_l = pl.reciprocal(jnp.sum(p, axis=-1, keepdims=True), approx=True)
        ctx = jnp.dot(p.astype(v.dtype), v,
                      preferred_element_type=jnp.float32)            # (tq, dh)
        outs.append(ctx * inv_l)

    # single full-H (lane-dense) store instead of nh masked dh-wide stores
    o_ref[0] = jnp.concatenate(outs, axis=-1).astype(o_ref.dtype)


def _out_proj_ln_kernel(x_ref, w_ref, b_ref, r_ref, g_ref, beta_ref, o_ref):
    """Attention out-projection + residual add + LayerNorm, weight resident."""
    y = jnp.dot(x_ref[...], w_ref[...], preferred_element_type=jnp.float32)
    y = y + b_ref[...] + r_ref[...].astype(jnp.float32)
    mu = jnp.mean(y, axis=-1, keepdims=True)
    var = jnp.mean((y - mu) ** 2, axis=-1, keepdims=True)
    y = (y - mu) * jax.lax.rsqrt(var + LN_EPS)
    o_ref[...] = (y * g_ref[...] + beta_ref[...]).astype(o_ref.dtype)


def _ffn_ln_kernel(x_ref, w1_ref, b1_ref, w2_ref, b2_ref, g_ref, beta_ref,
                   o_ref):
    """Fused FFN: GELU(x @ w1 + b1) @ w2 + b2 + x, then LayerNorm.
    Both weights VMEM-resident; the (tm, I) intermediate never hits HBM."""
    x = x_ref[...]
    h = jnp.dot(x, w1_ref[...], preferred_element_type=jnp.float32) + b1_ref[...]
    # TODO(synk): HF PhoBERT uses exact (erf) GELU; tanh approximation used
    # here for robust Mosaic lowering (EUP tanh). ~1e-3 logit deviation.
    c = math.sqrt(2.0 / math.pi)
    h = 0.5 * h * (1.0 + jnp.tanh(c * (h + 0.044715 * h * h * h)))
    y = jnp.dot(h.astype(w2_ref.dtype), w2_ref[...],
                preferred_element_type=jnp.float32)
    y = y + b2_ref[...] + x.astype(jnp.float32)
    mu = jnp.mean(y, axis=-1, keepdims=True)
    var = jnp.mean((y - mu) ** 2, axis=-1, keepdims=True)
    y = (y - mu) * jax.lax.rsqrt(var + LN_EPS)
    o_ref[...] = (y * g_ref[...] + beta_ref[...]).astype(o_ref.dtype)


# ----------------------------- kernel wrappers ------------------------------

def layernorm(x, g, b, *, out_dtype=jnp.bfloat16, tm_n=512):
    M, H = x.shape
    tm = _tile_m(M, tm_n)
    return pl.pallas_call(
        _layernorm_kernel,
        out_shape=jax.ShapeDtypeStruct((M, H), out_dtype),
        grid=(M // tm,),
        in_specs=[pl.BlockSpec((tm, H), lambda i: (i, 0)),
                  pl.BlockSpec((1, H), lambda i: (0, 0)),
                  pl.BlockSpec((1, H), lambda i: (0, 0))],
        out_specs=pl.BlockSpec((tm, H), lambda i: (i, 0)),
        compiler_params=pltpu.CompilerParams(
            dimension_semantics=("parallel",),
            vmem_limit_bytes=VMEM_LIMIT),
    )(x, g.reshape(1, H), b.reshape(1, H))


def qkv_projection(x, w, b, *, out_dtype=jnp.bfloat16, tm_n=256):
    M, H = x.shape
    tm = _tile_m(M, tm_n)
    out = jax.ShapeDtypeStruct((M, H), out_dtype)
    return pl.pallas_call(
        _qkv_proj_kernel,
        out_shape=(out, out, out),
        grid=(M // tm,),
        in_specs=[pl.BlockSpec((tm, H), lambda i: (i, 0)),
                  pl.BlockSpec((3, H, H), lambda i: (0, 0, 0)),
                  pl.BlockSpec((3, 1, H), lambda i: (0, 0, 0))],
        out_specs=(pl.BlockSpec((tm, H), lambda i: (i, 0)),
                   pl.BlockSpec((tm, H), lambda i: (i, 0)),
                   pl.BlockSpec((tm, H), lambda i: (i, 0))),
        compiler_params=pltpu.CompilerParams(
            dimension_semantics=("parallel",),
            vmem_limit_bytes=VMEM_LIMIT),
        cost_estimate=pl.CostEstimate(
            flops=2 * M * H * 3 * H, transcendentals=0,
            bytes_accessed=(M * H + 3 * H * H + 3 * M * H) * 2),
    )(x, w, b)


def attention(q, k, v, bias_row, nh, *, tq_n=256):
    """q, k, v: (B, S, H) head-major columns.  bias_row: (B, 1, S) f32."""
    B, S, H = q.shape
    dh = H // nh
    tq = _tile_m(S, tq_n)
    kernel = functools.partial(_attention_kernel, nh=nh, dh=dh,
                               scale=1.0 / math.sqrt(dh))
    return pl.pallas_call(
        kernel,
        out_shape=jax.ShapeDtypeStruct((B, S, H), q.dtype),
        grid=(B, S // tq),
        in_specs=[
            pl.BlockSpec((1, 1, S), lambda b, qi: (b, 0, 0)),
            pl.BlockSpec((1, tq, H), lambda b, qi: (b, qi, 0)),
            pl.BlockSpec((1, S, H), lambda b, qi: (b, 0, 0)),
            pl.BlockSpec((1, S, H), lambda b, qi: (b, 0, 0)),
        ],
        out_specs=pl.BlockSpec((1, tq, H), lambda b, qi: (b, qi, 0)),
        compiler_params=pltpu.CompilerParams(
            dimension_semantics=("parallel", "parallel"),
            vmem_limit_bytes=VMEM_LIMIT),
        cost_estimate=pl.CostEstimate(
            flops=4 * B * nh * S * S * dh,
            transcendentals=B * nh * S * S,
            bytes_accessed=4 * B * S * H * 2 + B * S * 4),
    )(bias_row, q, k, v)


def out_proj_layernorm(x, w, b, res, g, beta, *, out_dtype=jnp.bfloat16,
                       tm_n=256):
    M, H = x.shape
    tm = _tile_m(M, tm_n)
    return pl.pallas_call(
        _out_proj_ln_kernel,
        out_shape=jax.ShapeDtypeStruct((M, H), out_dtype),
        grid=(M // tm,),
        in_specs=[pl.BlockSpec((tm, H), lambda i: (i, 0)),
                  pl.BlockSpec((H, H), lambda i: (0, 0)),
                  pl.BlockSpec((1, H), lambda i: (0, 0)),
                  pl.BlockSpec((tm, H), lambda i: (i, 0)),
                  pl.BlockSpec((1, H), lambda i: (0, 0)),
                  pl.BlockSpec((1, H), lambda i: (0, 0))],
        out_specs=pl.BlockSpec((tm, H), lambda i: (i, 0)),
        compiler_params=pltpu.CompilerParams(
            dimension_semantics=("parallel",),
            vmem_limit_bytes=VMEM_LIMIT),
        cost_estimate=pl.CostEstimate(
            flops=2 * M * H * H, transcendentals=M,
            bytes_accessed=(3 * M * H + H * H) * 2),
    )(x, w, b.reshape(1, H), res, g.reshape(1, H), beta.reshape(1, H))


def ffn_layernorm(x, w1, b1, w2, b2, g, beta, *, out_dtype=jnp.bfloat16,
                  tm_n=256):
    M, H = x.shape
    I = w1.shape[1]
    tm = _tile_m(M, tm_n)
    return pl.pallas_call(
        _ffn_ln_kernel,
        out_shape=jax.ShapeDtypeStruct((M, H), out_dtype),
        grid=(M // tm,),
        in_specs=[pl.BlockSpec((tm, H), lambda i: (i, 0)),
                  pl.BlockSpec((H, I), lambda i: (0, 0)),
                  pl.BlockSpec((1, I), lambda i: (0, 0)),
                  pl.BlockSpec((I, H), lambda i: (0, 0)),
                  pl.BlockSpec((1, H), lambda i: (0, 0)),
                  pl.BlockSpec((1, H), lambda i: (0, 0)),
                  pl.BlockSpec((1, H), lambda i: (0, 0))],
        out_specs=pl.BlockSpec((tm, H), lambda i: (i, 0)),
        compiler_params=pltpu.CompilerParams(
            dimension_semantics=("parallel",),
            vmem_limit_bytes=VMEM_LIMIT),
        cost_estimate=pl.CostEstimate(
            flops=4 * M * H * I, transcendentals=M * I,
            bytes_accessed=(2 * M * H + 2 * H * I) * 2),
    )(x, w1, b1.reshape(1, I), w2, b2.reshape(1, H),
      g.reshape(1, H), beta.reshape(1, H))


# ----------------------------- model forward --------------------------------

def encoder_layer(x, bias_row, p, cfg):
    B, S, H = cfg['batch'], cfg['seq'], cfg['hidden']
    nh = cfg['heads']

    # fused QKV projection -> three (B*S, H) arrays (free reshape to (B,S,H))
    q, k, v = qkv_projection(x, p['qkv_w'], p['qkv_b'])
    q = q.reshape(B, S, H)
    k = k.reshape(B, S, H)
    v = v.reshape(B, S, H)

    ctx = attention(q, k, v, bias_row, nh)            # (B, S, H), no transposes
    ctx = ctx.reshape(B * S, H)                       # free view

    # attention out-proj + residual + LayerNorm1 (dropout -> identity, eval)
    x = out_proj_layernorm(ctx, p['o_w'], p['o_b'], x, p['ln1_g'], p['ln1_b'])

    # fused FFN (GELU + out-proj) + residual + LayerNorm2
    x = ffn_layernorm(x, p['i_w'], p['i_b'], p['out_w'], p['out_b'],
                      p['ln2_g'], p['ln2_b'])
    return x


def phobert_forward(params, input_ids, attention_mask, cfg):
    B, S = input_ids.shape
    H = cfg['hidden']
    pad_idx = 1  # RoBERTa/PhoBERT padding_idx

    # --- embeddings (gathers are glue; LayerNorm runs in a Pallas kernel) ---
    word = jnp.take(params['word_emb'], input_ids, axis=0)
    pos_mask = (input_ids != pad_idx).astype(jnp.int32)
    position_ids = jnp.cumsum(pos_mask, axis=1) * pos_mask + pad_idx
    pos = jnp.take(params['pos_emb'], position_ids, axis=0)
    tok = params['type_emb'][0]                 # token_type_ids == 0
    emb = (word + pos + tok).astype(jnp.float32)
    x = layernorm(emb.reshape(B * S, H), params['emb_ln_g'], params['emb_ln_b'])
    # embeddings dropout -> identity (eval)

    # --- additive attention bias: tiny (B, 1, S) row, broadcast in-kernel ---
    bias_row = ((1.0 - attention_mask.astype(jnp.float32)) * -1e9).reshape(B, 1, S)

    # --- encoder ---
    for layer_params in params['layers']:
        x = encoder_layer(x, bias_row, layer_params, cfg)

    last_hidden = x.reshape(B, S, H)
    pooled = last_hidden[:, 0].astype(jnp.float32)   # last_hidden_state[:, 0]
    # classifier dropout -> identity (eval); tiny (B,H)x(H,3) head in plain
    # jnp per perf review (negligible work, avoids a masked 3-lane Pallas tile)
    logits = pooled @ params['cls_w'] + params['cls_b']
    return logits


# ----------------------------- parameter init -------------------------------

def init_params(key, cfg):
    keys = iter(jax.random.split(key, 256))
    std = 0.02  # initializer_range / nn.init.normal_(std=0.02) for classifier

    def nrm(shape, dtype=jnp.bfloat16):
        return (jax.random.normal(next(keys), shape, jnp.float32) * std).astype(dtype)

    H, I, NC = cfg['hidden'], cfg['intermediate'], cfg['num_classes']
    params = {
        'word_emb': nrm((cfg['vocab'], H), jnp.float32),
        'pos_emb': nrm((cfg['max_pos'], H), jnp.float32),
        'type_emb': nrm((1, H), jnp.float32),
        'emb_ln_g': jnp.ones((H,), jnp.float32),
        'emb_ln_b': jnp.zeros((H,), jnp.float32),
        'cls_w': nrm((H, NC), jnp.float32),
        'cls_b': jnp.zeros((NC,), jnp.float32),
        'layers': [],
    }
    for _ in range(cfg['layers']):
        params['layers'].append({
            'qkv_w': nrm((3, H, H)),                       # stacked [Wq, Wk, Wv]
            'qkv_b': jnp.zeros((3, 1, H), jnp.float32),
            'o_w': nrm((H, H)), 'o_b': jnp.zeros((H,), jnp.float32),
            'ln1_g': jnp.ones((H,), jnp.float32),
            'ln1_b': jnp.zeros((H,), jnp.float32),
            'i_w': nrm((H, I)), 'i_b': jnp.zeros((I,), jnp.float32),
            'out_w': nrm((I, H)), 'out_b': jnp.zeros((H,), jnp.float32),
            'ln2_g': jnp.ones((H,), jnp.float32),
            'ln2_b': jnp.zeros((H,), jnp.float32),
        })
    return params


# --------------------------------- main --------------------------------------

if __name__ == "__main__":
    cfg = dict(batch=2, seq=8, hidden=32, heads=2, layers=2,
               intermediate=64, vocab=64, max_pos=20, num_classes=3)

    key = jax.random.PRNGKey(0)
    k_param, k_ids = jax.random.split(key)

    params = init_params(k_param, cfg)

    B, S = cfg['batch'], cfg['seq']
    input_ids = jax.random.randint(k_ids, (B, S), 5, cfg['vocab'], dtype=jnp.int32)
    input_ids = input_ids.at[:, 0].set(0)          # <s> / CLS token
    input_ids = input_ids.at[1, S - 2:].set(1)     # pad the tail of sample 1
    attention_mask = (input_ids != 1).astype(jnp.int32)

    fwd = jax.jit(lambda p, ids, mask: phobert_forward(p, ids, mask, cfg))
    logits = fwd(params, input_ids, attention_mask)
    jax.block_until_ready(logits)

    assert logits.shape == (B, cfg['num_classes'])
    assert bool(jnp.all(jnp.isfinite(logits)))
    print("KERNEL_OK")
</pallas_src>

<mosaic_0001>
module attributes {stable_mosaic.version = 11 : i64} {
  func.func @_out_proj_ln_kernel(%arg0: i32, %arg1: memref<16x32xbf16, #tpu.memory_space<vmem>>, %arg2: memref<32x32xbf16, #tpu.memory_space<vmem>>, %arg3: memref<1x32xf32, #tpu.memory_space<vmem>>, %arg4: memref<16x32xbf16, #tpu.memory_space<vmem>>, %arg5: memref<1x32xf32, #tpu.memory_space<vmem>>, %arg6: memref<1x32xf32, #tpu.memory_space<vmem>>, %arg7: memref<16x32xbf16, #tpu.memory_space<vmem>>) attributes {dimension_semantics = [#tpu.dimension_semantics<parallel>], iteration_bounds = array<i64: 1>, scalar_prefetch = 0 : i64, scratch_operands = 0 : i64, tpu.core_type = #tpu.core_type<tc>, window_params = [{transform_indices = @transform_0, window_bounds = array<i64: 16, 32>}, {pipeline_mode = #tpu.pipeline_mode<synchronous>, transform_indices = @transform_1, window_bounds = array<i64: 32, 32>}, {pipeline_mode = #tpu.pipeline_mode<synchronous>, transform_indices = @transform_2, window_bounds = array<i64: 1, 32>}, {transform_indices = @transform_3, window_bounds = array<i64: 16, 32>}, {pipeline_mode = #tpu.pipeline_mode<synchronous>, transform_indices = @transform_4, window_bounds = array<i64: 1, 32>}, {pipeline_mode = #tpu.pipeline_mode<synchronous>, transform_indices = @transform_5, window_bounds = array<i64: 1, 32>}, {transform_indices = @transform_6, window_bounds = array<i64: 16, 32>}]} {
    %c0 = arith.constant 0 : index
    %c0_0 = arith.constant 0 : index
    %0 = vector.load %arg1[%c0, %c0_0] : memref<16x32xbf16, #tpu.memory_space<vmem>>, vector<16x32xbf16>
    %c0_1 = arith.constant 0 : index
    %c0_2 = arith.constant 0 : index
    %1 = vector.load %arg2[%c0_1, %c0_2] : memref<32x32xbf16, #tpu.memory_space<vmem>>, vector<32x32xbf16>
    %cst = arith.constant dense<0.000000e+00> : vector<16x32xf32>
    %2 = tpu.matmul %0, %1, %cst {dimension_numbers = #tpu.dot_dimension_numbers<[1], [0], [0], [1], [0, 0, 1, 1], [], []>} : vector<16x32xbf16>, vector<32x32xbf16>, vector<16x32xf32> -> vector<16x32xf32>
    %c0_3 = arith.constant 0 : index
    %c0_4 = arith.constant 0 : index
    %3 = vector.load %arg3[%c0_3, %c0_4] : memref<1x32xf32, #tpu.memory_space<vmem>>, vector<1x32xf32>
    %4 = vector.broadcast %3 : vector<1x32xf32> to vector<16x32xf32>
    %5 = arith.addf %2, %4 : vector<16x32xf32>
    %c0_5 = arith.constant 0 : index
    %c0_6 = arith.constant 0 : index
    %6 = vector.load %arg4[%c0_5, %c0_6] : memref<16x32xbf16, #tpu.memory_space<vmem>>, vector<16x32xbf16>
    %7 = arith.extf %6 : vector<16x32xbf16> to vector<16x32xf32>
    %8 = arith.addf %5, %7 : vector<16x32xf32>
    %cst_7 = arith.constant dense<0.000000e+00> : vector<16xf32>
    %9 = vector.multi_reduction <add>, %8, %cst_7 [1] : vector<16x32xf32> to vector<16xf32>
    %10 = vector.shape_cast %9 : vector<16xf32> to vector<16x1xf32>
    %cst_8 = arith.constant 3.200000e+01 : f32
    %11 = vector.broadcast %cst_8 : f32 to vector<16x1xf32>
    %12 = arith.divf %10, %11 : vector<16x1xf32>
    %13 = vector.broadcast %12 : vector<16x1xf32> to vector<16x32xf32>
    %14 = arith.subf %8, %13 : vector<16x32xf32>
    %15 = arith.mulf %14, %14 : vector<16x32xf32>
    %cst_9 = arith.constant dense<0.000000e+00> : vector<16xf32>
    %16 = vector.multi_reduction <add>, %15, %cst_9 [1] : vector<16x32xf32> to vector<16xf32>
    %17 = vector.shape_cast %16 : vector<16xf32> to vector<16x1xf32>
    %cst_10 = arith.constant 3.200000e+01 : f32
    %18 = vector.broadcast %cst_10 : f32 to vector<16x1xf32>
    %19 = arith.divf %17, %18 : vector<16x1xf32>
    %20 = vector.broadcast %12 : vector<16x1xf32> to vector<16x32xf32>
    %21 = arith.subf %8, %20 : vector<16x32xf32>
    %cst_11 = arith.constant 9.99999974E-6 : f32
    %22 = vector.broadcast %cst_11 : f32 to vector<16x1xf32>
    %23 = arith.addf %19, %22 : vector<16x1xf32>
    %24 = math.rsqrt %23 : vector<16x1xf32>
    %25 = vector.broadcast %24 : vector<16x1xf32> to vector<16x32xf32>
    %26 = arith.mulf %21, %25 : vector<16x32xf32>
    %c0_12 = arith.constant 0 : index
    %c0_13 = arith.constant 0 : index
    %27 = vector.load %arg5[%c0_12, %c0_13] : memref<1x32xf32, #tpu.memory_space<vmem>>, vector<1x32xf32>
    %28 = vector.broadcast %27 : vector<1x32xf32> to vector<16x32xf32>
    %29 = arith.mulf %26, %28 : vector<16x32xf32>
    %c0_14 = arith.constant 0 : index
    %c0_15 = arith.constant 0 : index
    %30 = vector.load %arg6[%c0_14, %c0_15] : memref<1x32xf32, #tpu.memory_space<vmem>>, vector<1x32xf32>
    %31 = vector.broadcast %30 : vector<1x32xf32> to vector<16x32xf32>
    %32 = arith.addf %29, %31 : vector<16x32xf32>
    %33 = arith.truncf %32 : vector<16x32xf32> to vector<16x32xbf16>
    %c0_16 = arith.constant 0 : index
    %c0_17 = arith.constant 0 : index
    %34 = vector.load %arg7[%c0_16, %c0_17] : memref<16x32xbf16, #tpu.memory_space<vmem>>, vector<16x32xbf16>
    tpu.vector_store %arg7[%c0_16, %c0_17], %33 {strides = array<i32>} : memref<16x32xbf16, #tpu.memory_space<vmem>>, vector<16x32xbf16>,
    return
  }
  func.func @transform_0(%arg0: i32) -> (i32, i32) {
    %c0_i32 = arith.constant 0 : i32
    %c0_i32_0 = arith.constant 0 : i32
    return %arg0, %c0_i32 : i32, i32
  }
  func.func @transform_1(%arg0: i32) -> (i32, i32) {
    %c0_i32 = arith.constant 0 : i32
    %c0_i32_0 = arith.constant 0 : i32
    %c0_i32_1 = arith.constant 0 : i32
    return %c0_i32, %c0_i32_0 : i32, i32
  }
  func.func @transform_2(%arg0: i32) -> (i32, i32) {
    %c0_i32 = arith.constant 0 : i32
    %c0_i32_0 = arith.constant 0 : i32
    %c0_i32_1 = arith.constant 0 : i32
    return %c0_i32, %c0_i32_0 : i32, i32
  }
  func.func @transform_3(%arg0: i32) -> (i32, i32) {
    %c0_i32 = arith.constant 0 : i32
    %c0_i32_0 = arith.constant 0 : i32
    return %arg0, %c0_i32 : i32, i32
  }
  func.func @transform_4(%arg0: i32) -> (i32, i32) {
    %c0_i32 = arith.constant 0 : i32
    %c0_i32_0 = arith.constant 0 : i32
    %c0_i32_1 = arith.constant 0 : i32
    return %c0_i32, %c0_i32_0 : i32, i32
  }
  func.func @transform_5(%arg0: i32) -> (i32, i32) {
    %c0_i32 = arith.constant 0 : i32
    %c0_i32_0 = arith.constant 0 : i32
    %c0_i32_1 = arith.constant 0 : i32
    return %c0_i32, %c0_i32_0 : i32, i32
  }
  func.func @transform_6(%arg0: i32) -> (i32, i32) {
    %c0_i32 = arith.constant 0 : i32
    %c0_i32_0 = arith.constant 0 : i32
    return %arg0, %c0_i32 : i32, i32
  }
}

module attributes {stable_mosaic.version = 11 : i64} {
  func.func @_layernorm_kernel(%arg0: i32, %arg1: memref<16x32xf32, #tpu.memory_space<vmem>>, %arg2: memref<1x32xf32, #tpu.memory_space<vmem>>, %arg3: memref<1x32xf32, #tpu.memory_space<vmem>>, %arg4: memref<16x32xbf16, #tpu.memory_space<vmem>>) attributes {dimension_semantics = [#tpu.dimension_semantics<parallel>], iteration_bounds = array<i64: 1>, scalar_prefetch = 0 : i64, scratch_operands = 0 : i64, tpu.core_type = #tpu.core_type<tc>, window_params = [{transform_indices = @transform_0, window_bounds = array<i64: 16, 32>}, {pipeline_mode = #tpu.pipeline_mode<synchronous>, transform_indices = @transform_1, window_bounds = array<i64: 1, 32>}, {pipeline_mode = #tpu.pipeline_mode<synchronous>, transform_indices = @transform_2, window_bounds = array<i64: 1, 32>}, {transform_indices = @transform_3, window_bounds = array<i64: 16, 32>}]} {
    %c0 = arith.constant 0 : index
    %c0_0 = arith.constant 0 : index
    %0 = vector.load %arg1[%c0, %c0_0] : memref<16x32xf32, #tpu.memory_space<vmem>>, vector<16x32xf32>
    %cst = arith.constant dense<0.000000e+00> : vector<16xf32>
    %1 = vector.multi_reduction <add>, %0, %cst [1] : vector<16x32xf32> to vector<16xf32>
    %2 = vector.shape_cast %1 : vector<16xf32> to vector<16x1xf32>
    %cst_1 = arith.constant 3.200000e+01 : f32
    %3 = vector.broadcast %cst_1 : f32 to vector<16x1xf32>
    %4 = arith.divf %2, %3 : vector<16x1xf32>
    %5 = vector.broadcast %4 : vector<16x1xf32> to vector<16x32xf32>
    %6 = arith.subf %0, %5 : vector<16x32xf32>
    %7 = arith.mulf %6, %6 : vector<16x32xf32>
    %cst_2 = arith.constant dense<0.000000e+00> : vector<16xf32>
    %8 = vector.multi_reduction <add>, %7, %cst_2 [1] : vector<16x32xf32> to vector<16xf32>
    %9 = vector.shape_cast %8 : vector<16xf32> to vector<16x1xf32>
    %cst_3 = arith.constant 3.200000e+01 : f32
    %10 = vector.broadcast %cst_3 : f32 to vector<16x1xf32>
    %11 = arith.divf %9, %10 : vector<16x1xf32>
    %12 = vector.broadcast %4 : vector<16x1xf32> to vector<16x32xf32>
    %13 = arith.subf %0, %12 : vector<16x32xf32>
    %cst_4 = arith.constant 9.99999974E-6 : f32
    %14 = vector.broadcast %cst_4 : f32 to vector<16x1xf32>
    %15 = arith.addf %11, %14 : vector<16x1xf32>
    %16 = math.rsqrt %15 : vector<16x1xf32>
    %17 = vector.broadcast %16 : vector<16x1xf32> to vector<16x32xf32>
    %18 = arith.mulf %13, %17 : vector<16x32xf32>
    %c0_5 = arith.constant 0 : index
    %c0_6 = arith.constant 0 : index
    %19 = vector.load %arg2[%c0_5, %c0_6] : memref<1x32xf32, #tpu.memory_space<vmem>>, vector<1x32xf32>
    %20 = vector.broadcast %19 : vector<1x32xf32> to vector<16x32xf32>
    %21 = arith.mulf %18, %20 : vector<16x32xf32>
    %c0_7 = arith.constant 0 : index
    %c0_8 = arith.constant 0 : index
    %22 = vector.load %arg3[%c0_7, %c0_8] : memref<1x32xf32, #tpu.memory_space<vmem>>, vector<1x32xf32>
    %23 = vector.broadcast %22 : vector<1x32xf32> to vector<16x32xf32>
    %24 = arith.addf %21, %23 : vector<16x32xf32>
    %25 = arith.truncf %24 : vector<16x32xf32> to vector<16x32xbf16>
    %c0_9 = arith.constant 0 : index
    %c0_10 = arith.constant 0 : index
    %26 = vector.load %arg4[%c0_9, %c0_10] : memref<16x32xbf16, #tpu.memory_space<vmem>>, vector<16x32xbf16>
    tpu.vector_store %arg4[%c0_9, %c0_10], %25 {strides = array<i32>} : memref<16x32xbf16, #tpu.memory_space<vmem>>, vector<16x32xbf16>,
    return
  }
  func.func @transform_0(%arg0: i32) -> (i32, i32) {
    %c0_i32 = arith.constant 0 : i32
    %c0_i32_0 = arith.constant 0 : i32
    return %arg0, %c0_i32 : i32, i32
  }
  func.func @transform_1(%arg0: i32) -> (i32, i32) {
    %c0_i32 = arith.constant 0 : i32
    %c0_i32_0 = arith.constant 0 : i32
    %c0_i32_1 = arith.constant 0 : i32
    return %c0_i32, %c0_i32_0 : i32, i32
  }
  func.func @transform_2(%arg0: i32) -> (i32, i32) {
    %c0_i32 = arith.constant 0 : i32
    %c0_i32_0 = arith.constant 0 : i32
    %c0_i32_1 = arith.constant 0 : i32
    return %c0_i32, %c0_i32_0 : i32, i32
  }
  func.func @transform_3(%arg0: i32) -> (i32, i32) {
    %c0_i32 = arith.constant 0 : i32
    %c0_i32_0 = arith.constant 0 : i32
    return %arg0, %c0_i32 : i32, i32
  }
}

module attributes {stable_mosaic.version = 11 : i64} {
  func.func @_qkv_proj_kernel(%arg0: i32, %arg1: memref<16x32xbf16, #tpu.memory_space<vmem>>, %arg2: memref<3x32x32xbf16, #tpu.memory_space<vmem>>, %arg3: memref<3x1x32xf32, #tpu.memory_space<vmem>>, %arg4: memref<16x32xbf16, #tpu.memory_space<vmem>>, %arg5: memref<16x32xbf16, #tpu.memory_space<vmem>>, %arg6: memref<16x32xbf16, #tpu.memory_space<vmem>>) attributes {dimension_semantics = [#tpu.dimension_semantics<parallel>], iteration_bounds = array<i64: 1>, scalar_prefetch = 0 : i64, scratch_operands = 0 : i64, tpu.core_type = #tpu.core_type<tc>, window_params = [{transform_indices = @transform_0, window_bounds = array<i64: 16, 32>}, {pipeline_mode = #tpu.pipeline_mode<synchronous>, transform_indices = @transform_1, window_bounds = array<i64: 3, 32, 32>}, {pipeline_mode = #tpu.pipeline_mode<synchronous>, transform_indices = @transform_2, window_bounds = array<i64: 3, 1, 32>}, {transform_indices = @transform_3, window_bounds = array<i64: 16, 32>}, {transform_indices = @transform_4, window_bounds = array<i64: 16, 32>}, {transform_indices = @transform_5, window_bounds = array<i64: 16, 32>}]} {
    %c0 = arith.constant 0 : index
    %c0_0 = arith.constant 0 : index
    %0 = vector.load %arg1[%c0, %c0_0] : memref<16x32xbf16, #tpu.memory_space<vmem>>, vector<16x32xbf16>
    %c0_1 = arith.constant 0 : index
    %c0_2 = arith.constant 0 : index
    %c0_3 = arith.constant 0 : index
    %1 = vector.load %arg2[%c0_1, %c0_2, %c0_3] : memref<3x32x32xbf16, #tpu.memory_space<vmem>>, vector<1x32x32xbf16>
    %2 = vector.shape_cast %1 : vector<1x32x32xbf16> to vector<32x32xbf16>
    %cst = arith.constant dense<0.000000e+00> : vector<16x32xf32>
    %3 = tpu.matmul %0, %2, %cst {dimension_numbers = #tpu.dot_dimension_numbers<[1], [0], [0], [1], [0, 0, 1, 1], [], []>} : vector<16x32xbf16>, vector<32x32xbf16>, vector<16x32xf32> -> vector<16x32xf32>
    %c0_4 = arith.constant 0 : index
    %c0_5 = arith.constant 0 : index
    %c0_6 = arith.constant 0 : index
    %4 = vector.load %arg3[%c0_4, %c0_5, %c0_6] : memref<3x1x32xf32, #tpu.memory_space<vmem>>, vector<1x1x32xf32>
    %5 = vector.shape_cast %4 : vector<1x1x32xf32> to vector<1x32xf32>
    %6 = vector.broadcast %5 : vector<1x32xf32> to vector<16x32xf32>
    %7 = arith.addf %3, %6 : vector<16x32xf32>
    %8 = arith.truncf %7 : vector<16x32xf32> to vector<16x32xbf16>
    %c0_7 = arith.constant 0 : index
    %c0_8 = arith.constant 0 : index
    %9 = vector.load %arg4[%c0_7, %c0_8] : memref<16x32xbf16, #tpu.memory_space<vmem>>, vector<16x32xbf16>
    tpu.vector_store %arg4[%c0_7, %c0_8], %8 {strides = array<i32>} : memref<16x32xbf16, #tpu.memory_space<vmem>>, vector<16x32xbf16>,
    %c1 = arith.constant 1 : index
    %c0_9 = arith.constant 0 : index
    %c0_10 = arith.constant 0 : index
    %10 = vector.load %arg2[%c1, %c0_9, %c0_10] : memref<3x32x32xbf16, #tpu.memory_space<vmem>>, vector<1x32x32xbf16>
    %11 = vector.shape_cast %10 : vector<1x32x32xbf16> to vector<32x32xbf16>
    %cst_11 = arith.constant dense<0.000000e+00> : vector<16x32xf32>
    %12 = tpu.matmul %0, %11, %cst_11 {dimension_numbers = #tpu.dot_dimension_numbers<[1], [0], [0], [1], [0, 0, 1, 1], [], []>} : vector<16x32xbf16>, vector<32x32xbf16>, vector<16x32xf32> -> vector<16x32xf32>
    %c1_12 = arith.constant 1 : index
    %c0_13 = arith.constant 0 : index
    %c0_14 = arith.constant 0 : index
    %13 = vector.load %arg3[%c1_12, %c0_13, %c0_14] : memref<3x1x32xf32, #tpu.memory_space<vmem>>, vector<1x1x32xf32>
    %14 = vector.shape_cast %13 : vector<1x1x32xf32> to vector<1x32xf32>
    %15 = vector.broadcast %14 : vector<1x32xf32> to vector<16x32xf32>
    %16 = arith.addf %12, %15 : vector<16x32xf32>
    %17 = arith.truncf %16 : vector<16x32xf32> to vector<16x32xbf16>
    %c0_15 = arith.constant 0 : index
    %c0_16 = arith.constant 0 : index
    %18 = vector.load %arg5[%c0_15, %c0_16] : memref<16x32xbf16, #tpu.memory_space<vmem>>, vector<16x32xbf16>
    tpu.vector_store %arg5[%c0_15, %c0_16], %17 {strides = array<i32>} : memref<16x32xbf16, #tpu.memory_space<vmem>>, vector<16x32xbf16>,
    %c2 = arith.constant 2 : index
    %c0_17 = arith.constant 0 : index
    %c0_18 = arith.constant 0 : index
    %19 = vector.load %arg2[%c2, %c0_17, %c0_18] : memref<3x32x32xbf16, #tpu.memory_space<vmem>>, vector<1x32x32xbf16>
    %20 = vector.shape_cast %19 : vector<1x32x32xbf16> to vector<32x32xbf16>
    %cst_19 = arith.constant dense<0.000000e+00> : vector<16x32xf32>
    %21 = tpu.matmul %0, %20, %cst_19 {dimension_numbers = #tpu.dot_dimension_numbers<[1], [0], [0], [1], [0, 0, 1, 1], [], []>} : vector<16x32xbf16>, vector<32x32xbf16>, vector<16x32xf32> -> vector<16x32xf32>
    %c2_20 = arith.constant 2 : index
    %c0_21 = arith.constant 0 : index
    %c0_22 = arith.constant 0 : index
    %22 = vector.load %arg3[%c2_20, %c0_21, %c0_22] : memref<3x1x32xf32, #tpu.memory_space<vmem>>, vector<1x1x32xf32>
    %23 = vector.shape_cast %22 : vector<1x1x32xf32> to vector<1x32xf32>
    %24 = vector.broadcast %23 : vector<1x32xf32> to vector<16x32xf32>
    %25 = arith.addf %21, %24 : vector<16x32xf32>
    %26 = arith.truncf %25 : vector<16x32xf32> to vector<16x32xbf16>
    %c0_23 = arith.constant 0 : index
    %c0_24 = arith.constant 0 : index
    %27 = vector.load %arg6[%c0_23, %c0_24] : memref<16x32xbf16, #tpu.memory_space<vmem>>, vector<16x32xbf16>
    tpu.vector_store %arg6[%c0_23, %c0_24], %26 {strides = array<i32>} : memref<16x32xbf16, #tpu.memory_space<vmem>>, vector<16x32xbf16>,
    return
  }
  func.func @transform_0(%arg0: i32) -> (i32, i32) {
    %c0_i32 = arith.constant 0 : i32
    %c0_i32_0 = arith.constant 0 : i32
    return %arg0, %c0_i32 : i32, i32
  }
  func.func @transform_1(%arg0: i32) -> (i32, i32, i32) {
    %c0_i32 = arith.constant 0 : i32
    %c0_i32_0 = arith.constant 0 : i32
    %c0_i32_1 = arith.constant 0 : i32
    %c0_i32_2 = arith.constant 0 : i32
    return %c0_i32, %c0_i32_0, %c0_i32_1 : i32, i32, i32
  }
  func.func @transform_2(%arg0: i32) -> (i32, i32, i32) {
    %c0_i32 = arith.constant 0 : i32
    %c0_i32_0 = arith.constant 0 : i32
    %c0_i32_1 = arith.constant 0 : i32
    %c0_i32_2 = arith.constant 0 : i32
    return %c0_i32, %c0_i32_0, %c0_i32_1 : i32, i32, i32
  }
  func.func @transform_3(%arg0: i32) -> (i32, i32) {
    %c0_i32 = arith.constant 0 : i32
    %c0_i32_0 = arith.constant 0 : i32
    return %arg0, %c0_i32 : i32, i32
  }
  func.func @transform_4(%arg0: i32) -> (i32, i32) {
    %c0_i32 = arith.constant 0 : i32
    %c0_i32_0 = arith.constant 0 : i32
    return %arg0, %c0_i32 : i32, i32
  }
  func.func @transform_5(%arg0: i32) -> (i32, i32) {
    %c0_i32 = arith.constant 0 : i32
    %c0_i32_0 = arith.constant 0 : i32
    return %arg0, %c0_i32 : i32, i32
  }
}

module attributes {stable_mosaic.version = 11 : i64} {
  func.func @_attention_kernel(%arg0: i32, %arg1: i32, %arg2: memref<1x1x8xf32, #tpu.memory_space<vmem>>, %arg3: memref<1x8x32xbf16, #tpu.memory_space<vmem>>, %arg4: memref<1x8x32xbf16, #tpu.memory_space<vmem>>, %arg5: memref<1x8x32xbf16, #tpu.memory_space<vmem>>, %arg6: memref<1x8x32xbf16, #tpu.memory_space<vmem>>) attributes {dimension_semantics = [#tpu.dimension_semantics<parallel>, #tpu.dimension_semantics<parallel>], iteration_bounds = array<i64: 2, 1>, scalar_prefetch = 0 : i64, scratch_operands = 0 : i64, tpu.core_type = #tpu.core_type<tc>, window_params = [{transform_indices = @transform_0, window_bounds = array<i64: 1, 1, 8>}, {transform_indices = @transform_1, window_bounds = array<i64: 1, 8, 32>}, {transform_indices = @transform_2, window_bounds = array<i64: 1, 8, 32>}, {transform_indices = @transform_3, window_bounds = array<i64: 1, 8, 32>}, {transform_indices = @transform_4, window_bounds = array<i64: 1, 8, 32>}]} {
    %c0 = arith.constant 0 : index
    %c0_0 = arith.constant 0 : index
    %c0_1 = arith.constant 0 : index
    %0 = vector.load %arg2[%c0, %c0_0, %c0_1] : memref<1x1x8xf32, #tpu.memory_space<vmem>>, vector<1x1x8xf32>
    %1 = vector.shape_cast %0 : vector<1x1x8xf32> to vector<1x8xf32>
    %c0_2 = arith.constant 0 : index
    %c0_3 = arith.constant 0 : index
    %c0_4 = arith.constant 0 : index
    %2 = vector.load %arg3[%c0_2, %c0_3, %c0_4] : memref<1x8x32xbf16, #tpu.memory_space<vmem>>, vector<1x8x32xbf16>
    %3 = vector.shape_cast %2 : vector<1x8x32xbf16> to vector<8x32xbf16>
    %c0_5 = arith.constant 0 : index
    %c0_6 = arith.constant 0 : index
    %c0_7 = arith.constant 0 : index
    %4 = vector.load %arg4[%c0_5, %c0_6, %c0_7] : memref<1x8x32xbf16, #tpu.memory_space<vmem>>, vector<1x8x32xbf16>
    %5 = vector.shape_cast %4 : vector<1x8x32xbf16> to vector<8x32xbf16>
    %c0_8 = arith.constant 0 : index
    %c0_9 = arith.constant 0 : index
    %c0_10 = arith.constant 0 : index
    %6 = vector.load %arg5[%c0_8, %c0_9, %c0_10] : memref<1x8x32xbf16, #tpu.memory_space<vmem>>, vector<1x8x32xbf16>
    %7 = vector.shape_cast %6 : vector<1x8x32xbf16> to vector<8x32xbf16>
    %8 = vector.extract_strided_slice %3 {offsets = [0, 0], sizes = [8, 16], strides = [1, 1]} : vector<8x32xbf16> to vector<8x16xbf16>
    %9 = vector.extract_strided_slice %5 {offsets = [0, 0], sizes = [8, 16], strides = [1, 1]} : vector<8x32xbf16> to vector<8x16xbf16>
    %10 = vector.extract_strided_slice %7 {offsets = [0, 0], sizes = [8, 16], strides = [1, 1]} : vector<8x32xbf16> to vector<8x16xbf16>
    %cst = arith.constant dense<0.000000e+00> : vector<8x8xf32>
    %11 = tpu.matmul %8, %9, %cst {dimension_numbers = #tpu.dot_dimension_numbers<[1], [1], [0], [0], [0, 0, 1, 0], [], []>} : vector<8x16xbf16>, vector<8x16xbf16>, vector<8x8xf32> -> vector<8x8xf32>
    %cst_11 = arith.constant 2.500000e-01 : f32
    %12 = vector.broadcast %cst_11 : f32 to vector<8x8xf32>
    %13 = arith.mulf %11, %12 : vector<8x8xf32>
    %14 = vector.broadcast %1 : vector<1x8xf32> to vector<8x8xf32>
    %15 = arith.addf %13, %14 : vector<8x8xf32>
    %cst_12 = arith.constant dense<0xFF800000> : vector<8xf32>
    %16 = vector.multi_reduction <maximumf>, %15, %cst_12 [1] : vector<8x8xf32> to vector<8xf32>
    %17 = vector.shape_cast %16 : vector<8xf32> to vector<8x1xf32>
    %18 = vector.broadcast %17 : vector<8x1xf32> to vector<8x8xf32>
    %19 = arith.subf %15, %18 : vector<8x8xf32>
    %20 = math.exp %19 : vector<8x8xf32>
    %cst_13 = arith.constant dense<0.000000e+00> : vector<8xf32>
    %21 = vector.multi_reduction <add>, %20, %cst_13 [1] : vector<8x8xf32> to vector<8xf32>
    %22 = vector.shape_cast %21 : vector<8xf32> to vector<8x1xf32>
    %23 = tpu.reciprocal %22 {approx = true} : vector<8x1xf32> -> vector<8x1xf32>
    %24 = arith.truncf %20 : vector<8x8xf32> to vector<8x8xbf16>
    %cst_14 = arith.constant dense<0.000000e+00> : vector<8x16xf32>
    %25 = tpu.matmul %24, %10, %cst_14 {dimension_numbers = #tpu.dot_dimension_numbers<[1], [0], [0], [1], [0, 0, 1, 1], [], []>} : vector<8x8xbf16>, vector<8x16xbf16>, vector<8x16xf32> -> vector<8x16xf32>
    %26 = vector.broadcast %23 : vector<8x1xf32> to vector<8x16xf32>
    %27 = arith.mulf %25, %26 : vector<8x16xf32>
    %28 = vector.extract_strided_slice %3 {offsets = [0, 16], sizes = [8, 16], strides = [1, 1]} : vector<8x32xbf16> to vector<8x16xbf16>
    %29 = vector.extract_strided_slice %5 {offsets = [0, 16], sizes = [8, 16], strides = [1, 1]} : vector<8x32xbf16> to vector<8x16xbf16>
    %30 = vector.extract_strided_slice %7 {offsets = [0, 16], sizes = [8, 16], strides = [1, 1]} : vector<8x32xbf16> to vector<8x16xbf16>
    %cst_15 = arith.constant dense<0.000000e+00> : vector<8x8xf32>
    %31 = tpu.matmul %28, %29, %cst_15 {dimension_numbers = #tpu.dot_dimension_numbers<[1], [1], [0], [0], [0, 0, 1, 0], [], []>} : vector<8x16xbf16>, vector<8x16xbf16>, vector<8x8xf32> -> vector<8x8xf32>
    %cst_16 = arith.constant 2.500000e-01 : f32
    %32 = vector.broadcast %cst_16 : f32 to vector<8x8xf32>
    %33 = arith.mulf %31, %32 : vector<8x8xf32>
    %34 = vector.broadcast %1 : vector<1x8xf32> to vector<8x8xf32>
    %35 = arith.addf %33, %34 : vector<8x8xf32>
    %cst_17 = arith.constant dense<0xFF800000> : vector<8xf32>
    %36 = vector.multi_reduction <maximumf>, %35, %cst_17 [1] : vector<8x8xf32> to vector<8xf32>
    %37 = vector.shape_cast %36 : vector<8xf32> to vector<8x1xf32>
    %38 = vector.broadcast %37 : vector<8x1xf32> to vector<8x8xf32>
    %39 = arith.subf %35, %38 : vector<8x8xf32>
    %40 = math.exp %39 : vector<8x8xf32>
    %cst_18 = arith.constant dense<0.000000e+00> : vector<8xf32>
    %41 = vector.multi_reduction <add>, %40, %cst_18 [1] : vector<8x8xf32> to vector<8xf32>
    %42 = vector.shape_cast %41 : vector<8xf32> to vector<8x1xf32>
    %43 = tpu.reciprocal %42 {approx = true} : vector<8x1xf32> -> vector<8x1xf32>
    %44 = arith.truncf %40 : vector<8x8xf32> to vector<8x8xbf16>
    %cst_19 = arith.constant dense<0.000000e+00> : vector<8x16xf32>
    %45 = tpu.matmul %44, %30, %cst_19 {dimension_numbers = #tpu.dot_dimension_numbers<[1], [0], [0], [1], [0, 0, 1, 1], [], []>} : vector<8x8xbf16>, vector<8x16xbf16>, vector<8x16xf32> -> vector<8x16xf32>
    %46 = vector.broadcast %43 : vector<8x1xf32> to vector<8x16xf32>
    %47 = arith.mulf %45, %46 : vector<8x16xf32>
    %48 = tpu.concatenate %27, %47 in 1 : vector<8x16xf32>, vector<8x16xf32> -> vector<8x32xf32>
    %49 = arith.truncf %48 : vector<8x32xf32> to vector<8x32xbf16>
    %c0_20 = arith.constant 0 : index
    %c0_21 = arith.constant 0 : index
    %c0_22 = arith.constant 0 : index
    %50 = vector.load %arg6[%c0_20, %c0_21, %c0_22] : memref<1x8x32xbf16, #tpu.memory_space<vmem>>, vector<1x8x32xbf16>
    %51 = vector.shape_cast %50 : vector<1x8x32xbf16> to vector<8x32xbf16>
    %52 = vector.shape_cast %49 : vector<8x32xbf16> to vector<1x8x32xbf16>
    tpu.vector_store %arg6[%c0_20, %c0_21, %c0_22], %52 {strides = array<i32>} : memref<1x8x32xbf16, #tpu.memory_space<vmem>>, vector<1x8x32xbf16>,
    return
  }
  func.func @transform_0(%arg0: i32, %arg1: i32) -> (i32, i32, i32) {
    %c0_i32 = arith.constant 0 : i32
    %c0_i32_0 = arith.constant 0 : i32
    %c0_i32_1 = arith.constant 0 : i32
    return %arg0, %c0_i32, %c0_i32_0 : i32, i32, i32
  }
  func.func @transform_1(%arg0: i32, %arg1: i32) -> (i32, i32, i32) {
    %c0_i32 = arith.constant 0 : i32
    %c0_i32_0 = arith.constant 0 : i32
    return %arg0, %arg1, %c0_i32 : i32, i32, i32
  }
  func.func @transform_2(%arg0: i32, %arg1: i32) -> (i32, i32, i32) {
    %c0_i32 = arith.constant 0 : i32
    %c0_i32_0 = arith.constant 0 : i32
    %c0_i32_1 = arith.constant 0 : i32
    return %arg0, %c0_i32, %c0_i32_0 : i32, i32, i32
  }
  func.func @transform_3(%arg0: i32, %arg1: i32) -> (i32, i32, i32) {
    %c0_i32 = arith.constant 0 : i32
    %c0_i32_0 = arith.constant 0 : i32
    %c0_i32_1 = arith.constant 0 : i32
    return %arg0, %c0_i32, %c0_i32_0 : i32, i32, i32
  }
  func.func @transform_4(%arg0: i32, %arg1: i32) -> (i32, i32, i32) {
    %c0_i32 = arith.constant 0 : i32
    %c0_i32_0 = arith.constant 0 : i32
    return %arg0, %arg1, %c0_i32 : i32, i32, i32
  }
}

module attributes {stable_mosaic.version = 11 : i64} {
  func.func @_ffn_ln_kernel(%arg0: i32, %arg1: memref<16x32xbf16, #tpu.memory_space<vmem>>, %arg2: memref<32x64xbf16, #tpu.memory_space<vmem>>, %arg3: memref<1x64xf32, #tpu.memory_space<vmem>>, %arg4: memref<64x32xbf16, #tpu.memory_space<vmem>>, %arg5: memref<1x32xf32, #tpu.memory_space<vmem>>, %arg6: memref<1x32xf32, #tpu.memory_space<vmem>>, %arg7: memref<1x32xf32, #tpu.memory_space<vmem>>, %arg8: memref<16x32xbf16, #tpu.memory_space<vmem>>) attributes {dimension_semantics = [#tpu.dimension_semantics<parallel>], iteration_bounds = array<i64: 1>, scalar_prefetch = 0 : i64, scratch_operands = 0 : i64, tpu.core_type = #tpu.core_type<tc>, window_params = [{transform_indices = @transform_0, window_bounds = array<i64: 16, 32>}, {pipeline_mode = #tpu.pipeline_mode<synchronous>, transform_indices = @transform_1, window_bounds = array<i64: 32, 64>}, {pipeline_mode = #tpu.pipeline_mode<synchronous>, transform_indices = @transform_2, window_bounds = array<i64: 1, 64>}, {pipeline_mode = #tpu.pipeline_mode<synchronous>, transform_indices = @transform_3, window_bounds = array<i64: 64, 32>}, {pipeline_mode = #tpu.pipeline_mode<synchronous>, transform_indices = @transform_4, window_bounds = array<i64: 1, 32>}, {pipeline_mode = #tpu.pipeline_mode<synchronous>, transform_indices = @transform_5, window_bounds = array<i64: 1, 32>}, {pipeline_mode = #tpu.pipeline_mode<synchronous>, transform_indices = @transform_6, window_bounds = array<i64: 1, 32>}, {transform_indices = @transform_7, window_bounds = array<i64: 16, 32>}]} {
    %c0 = arith.constant 0 : index
    %c0_0 = arith.constant 0 : index
    %0 = vector.load %arg1[%c0, %c0_0] : memref<16x32xbf16, #tpu.memory_space<vmem>>, vector<16x32xbf16>
    %c0_1 = arith.constant 0 : index
    %c0_2 = arith.constant 0 : index
    %1 = vector.load %arg2[%c0_1, %c0_2] : memref<32x64xbf16, #tpu.memory_space<vmem>>, vector<32x64xbf16>
    %cst = arith.constant dense<0.000000e+00> : vector<16x64xf32>
    %2 = tpu.matmul %0, %1, %cst {dimension_numbers = #tpu.dot_dimension_numbers<[1], [0], [0], [1], [0, 0, 1, 1], [], []>} : vector<16x32xbf16>, vector<32x64xbf16>, vector<16x64xf32> -> vector<16x64xf32>
    %c0_3 = arith.constant 0 : index
    %c0_4 = arith.constant 0 : index
    %3 = vector.load %arg3[%c0_3, %c0_4] : memref<1x64xf32, #tpu.memory_space<vmem>>, vector<1x64xf32>
    %4 = vector.broadcast %3 : vector<1x64xf32> to vector<16x64xf32>
    %5 = arith.addf %2, %4 : vector<16x64xf32>
    %cst_5 = arith.constant 5.000000e-01 : f32
    %6 = vector.broadcast %cst_5 : f32 to vector<16x64xf32>
    %7 = arith.mulf %6, %5 : vector<16x64xf32>
    %cst_6 = arith.constant 4.471500e-02 : f32
    %8 = vector.broadcast %cst_6 : f32 to vector<16x64xf32>
    %9 = arith.mulf %8, %5 : vector<16x64xf32>
    %10 = arith.mulf %9, %5 : vector<16x64xf32>
    %11 = arith.mulf %10, %5 : vector<16x64xf32>
    %12 = arith.addf %5, %11 : vector<16x64xf32>
    %cst_7 = arith.constant 0.797884583 : f32
    %13 = vector.broadcast %cst_7 : f32 to vector<16x64xf32>
    %14 = arith.mulf %13, %12 : vector<16x64xf32>
    %15 = math.tanh %14 : vector<16x64xf32>
    %cst_8 = arith.constant 1.000000e+00 : f32
    %16 = vector.broadcast %cst_8 : f32 to vector<16x64xf32>
    %17 = arith.addf %16, %15 : vector<16x64xf32>
    %18 = arith.mulf %7, %17 : vector<16x64xf32>
    %19 = arith.truncf %18 : vector<16x64xf32> to vector<16x64xbf16>
    %c0_9 = arith.constant 0 : index
    %c0_10 = arith.constant 0 : index
    %20 = vector.load %arg4[%c0_9, %c0_10] : memref<64x32xbf16, #tpu.memory_space<vmem>>, vector<64x32xbf16>
    %cst_11 = arith.constant dense<0.000000e+00> : vector<16x32xf32>
    %21 = tpu.matmul %19, %20, %cst_11 {dimension_numbers = #tpu.dot_dimension_numbers<[1], [0], [0], [1], [0, 0, 1, 1], [], []>} : vector<16x64xbf16>, vector<64x32xbf16>, vector<16x32xf32> -> vector<16x32xf32>
    %c0_12 = arith.constant 0 : index
    %c0_13 = arith.constant 0 : index
    %22 = vector.load %arg5[%c0_12, %c0_13] : memref<1x32xf32, #tpu.memory_space<vmem>>, vector<1x32xf32>
    %23 = vector.broadcast %22 : vector<1x32xf32> to vector<16x32xf32>
    %24 = arith.addf %21, %23 : vector<16x32xf32>
    %25 = arith.extf %0 : vector<16x32xbf16> to vector<16x32xf32>
    %26 = arith.addf %24, %25 : vector<16x32xf32>
    %cst_14 = arith.constant dense<0.000000e+00> : vector<16xf32>
    %27 = vector.multi_reduction <add>, %26, %cst_14 [1] : vector<16x32xf32> to vector<16xf32>
    %28 = vector.shape_cast %27 : vector<16xf32> to vector<16x1xf32>
    %cst_15 = arith.constant 3.200000e+01 : f32
    %29 = vector.broadcast %cst_15 : f32 to vector<16x1xf32>
    %30 = arith.divf %28, %29 : vector<16x1xf32>
    %31 = vector.broadcast %30 : vector<16x1xf32> to vector<16x32xf32>
    %32 = arith.subf %26, %31 : vector<16x32xf32>
    %33 = arith.mulf %32, %32 : vector<16x32xf32>
    %cst_16 = arith.constant dense<0.000000e+00> : vector<16xf32>
    %34 = vector.multi_reduction <add>, %33, %cst_16 [1] : vector<16x32xf32> to vector<16xf32>
    %35 = vector.shape_cast %34 : vector<16xf32> to vector<16x1xf32>
    %cst_17 = arith.constant 3.200000e+01 : f32
    %36 = vector.broadcast %cst_17 : f32 to vector<16x1xf32>
    %37 = arith.divf %35, %36 : vector<16x1xf32>
    %38 = vector.broadcast %30 : vector<16x1xf32> to vector<16x32xf32>
    %39 = arith.subf %26, %38 : vector<16x32xf32>
    %cst_18 = arith.constant 9.99999974E-6 : f32
    %40 = vector.broadcast %cst_18 : f32 to vector<16x1xf32>
    %41 = arith.addf %37, %40 : vector<16x1xf32>
    %42 = math.rsqrt %41 : vector<16x1xf32>
    %43 = vector.broadcast %42 : vector<16x1xf32> to vector<16x32xf32>
    %44 = arith.mulf %39, %43 : vector<16x32xf32>
    %c0_19 = arith.constant 0 : index
    %c0_20 = arith.constant 0 : index
    %45 = vector.load %arg6[%c0_19, %c0_20] : memref<1x32xf32, #tpu.memory_space<vmem>>, vector<1x32xf32>
    %46 = vector.broadcast %45 : vector<1x32xf32> to vector<16x32xf32>
    %47 = arith.mulf %44, %46 : vector<16x32xf32>
    %c0_21 = arith.constant 0 : index
    %c0_22 = arith.constant 0 : index
    %48 = vector.load %arg7[%c0_21, %c0_22] : memref<1x32xf32, #tpu.memory_space<vmem>>, vector<1x32xf32>
    %49 = vector.broadcast %48 : vector<1x32xf32> to vector<16x32xf32>
    %50 = arith.addf %47, %49 : vector<16x32xf32>
    %51 = arith.truncf %50 : vector<16x32xf32> to vector<16x32xbf16>
    %c0_23 = arith.constant 0 : index
    %c0_24 = arith.constant 0 : index
    %52 = vector.load %arg8[%c0_23, %c0_24] : memref<16x32xbf16, #tpu.memory_space<vmem>>, vector<16x32xbf16>
    tpu.vector_store %arg8[%c0_23, %c0_24], %51 {strides = array<i32>} : memref<16x32xbf16, #tpu.memory_space<vmem>>, vector<16x32xbf16>,
    return
  }
  func.func @transform_0(%arg0: i32) -> (i32, i32) {
    %c0_i32 = arith.constant 0 : i32
    %c0_i32_0 = arith.constant 0 : i32
    return %arg0, %c0_i32 : i32, i32
  }
  func.func @transform_1(%arg0: i32) -> (i32, i32) {
    %c0_i32 = arith.constant 0 : i32
    %c0_i32_0 = arith.constant 0 : i32
    %c0_i32_1 = arith.constant 0 : i32
    return %c0_i32, %c0_i32_0 : i32, i32
  }
  func.func @transform_2(%arg0: i32) -> (i32, i32) {
    %c0_i32 = arith.constant 0 : i32
    %c0_i32_0 = arith.constant 0 : i32
    %c0_i32_1 = arith.constant 0 : i32
    return %c0_i32, %c0_i32_0 : i32, i32
  }
  func.func @transform_3(%arg0: i32) -> (i32, i32) {
    %c0_i32 = arith.constant 0 : i32
    %c0_i32_0 = arith.constant 0 : i32
    %c0_i32_1 = arith.constant 0 : i32
    return %c0_i32, %c0_i32_0 : i32, i32
  }
  func.func @transform_4(%arg0: i32) -> (i32, i32) {
    %c0_i32 = arith.constant 0 : i32
    %c0_i32_0 = arith.constant 0 : i32
    %c0_i32_1 = arith.constant 0 : i32
    return %c0_i32, %c0_i32_0 : i32, i32
  }
  func.func @transform_5(%arg0: i32) -> (i32, i32) {
    %c0_i32 = arith.constant 0 : i32
    %c0_i32_0 = arith.constant 0 : i32
    %c0_i32_1 = arith.constant 0 : i32
    return %c0_i32, %c0_i32_0 : i32, i32
  }
  func.func @transform_6(%arg0: i32) -> (i32, i32) {
    %c0_i32 = arith.constant 0 : i32
    %c0_i32_0 = arith.constant 0 : i32
    %c0_i32_1 = arith.constant 0 : i32
    return %c0_i32, %c0_i32_0 : i32, i32
  }
  func.func @transform_7(%arg0: i32) -> (i32, i32) {
    %c0_i32 = arith.constant 0 : i32
    %c0_i32_0 = arith.constant 0 : i32
    return %arg0, %c0_i32 : i32, i32
  }
}

</mosaic_0001>

<llo_original>
// kernel: _lambda_.9
$region0: #{_lambda_.9}
  #allocation0 [shape = 'u32[]', space=smem, size = 0x4, offset = 0x4, fixed_abs, tag = 'smem constant byte address 0x4 - core index']
  #allocation1 [shape = 'u32[72,128]{1,0:T(1,128)}', space=vmem, size = 0x9000, scoped, tag = 'internal scratch']
  %s0 = inlined_call_operand.vmem [shape: f32[16,32], index: 0, kind: input, shape index: {}]
  %s1 = inlined_call_operand.vmem [shape: f32[1,32], index: 1, kind: input, shape index: {}]
  %s2 = inlined_call_operand.vmem [shape: f32[1,32], index: 2, kind: input, shape index: {}]
  %s3 = inlined_call_operand.vmem [shape: bf16[16,32], index: 3, kind: output, shape index: {}]
  %s4 = sld [smem:[#allocation0]]
  $region22: #{_lambda_.9} parent=0
    _
  %s6 = ssub.s32 1, %s4
  %s7 = scalar_select 0, %s6, %s4
  // Predicated region
  $region2: #{_lambda_.9} parent=0 // pred_check
    _
  $region3: #{_lambda_.9} parent=0 // pred_check_branch
    %9 = sbr.rel (0) target = $region5
  $region4: #{_lambda_.9} parent=0 // pred_region
    _
  $region5: #{_lambda_.9} parent=0 // pred_fallthru
    _
  // Predicated region
  $region6: #{_lambda_.9} parent=0 // pred_check
    _
  $region7: #{_lambda_.9} parent=0 // pred_check_branch
    %11 = sbr.rel (0) target = $region9
  $region8: #{_lambda_.9} parent=0 // pred_region
    _
  $region9: #{_lambda_.9} parent=0 // pred_fallthru
    _
  // Predicated region
  $region10: #{_lambda_.9} parent=0 // pred_check
    _
  $region11: #{_lambda_.9} parent=0 // pred_check_branch
    %13 = sbr.rel (0) target = $region13
  $region12: #{_lambda_.9} parent=0 // pred_region
    _
  $region13: #{_lambda_.9} parent=0 // pred_fallthru
    _
  %v14 = vld [vmem:[%s0] sm:$0xff]
  %v15 = vld [vmem:[%s0 + $0x8] sm:$0xff]
  %vm16 = vcmask 261120
  %v17 = vsel %vm16, %v14, 0.0
  %18 = vadd.xlane.f32.xlu0 %v17
  %v19 = vpop.xlane.xlu0 %18
  %v20 = vsel %vm16, %v15, 0.0
  %21 = vadd.xlane.f32.xlu0 %v20
  %v22 = vpop.xlane.xlu0 %21
  %v23 = vrcp.pop 32.0
  %v24 = vmul.f32 32.0, %v23
  %v25 = vsub.f32 1.0, %v24
  %v26 = vmul.f32 %v23, %v25
  %v27 = vadd.f32 %v23, %v26
  %vm28 = vweird.f32 %v23
  %v29 = vsel %vm28, %v23, %v27
  %v30 = vmul.f32 %v19, %v29
  %v31 = vmul.f32 %v22, %v29
  %v32 = vsub.f32 %v14, %v30
  %v33 = vsub.f32 %v15, %v31
  %v34 = vmul.f32 %v32, %v32
  %v35 = vmul.f32 %v33, %v33
  %v36 = vsel %vm16, %v34, 0.0
  %37 = vadd.xlane.f32.xlu0 %v36
  %v38 = vpop.xlane.xlu0 %37
  %v39 = vsel %vm16, %v35, 0.0
  %40 = vadd.xlane.f32.xlu0 %v39
  %v41 = vpop.xlane.xlu0 %40
  %v42 = vmul.f32 %v38, %v29
  %v43 = vmul.f32 %v41, %v29
  %v44 = vadd.f32 %v42, 1e-05
  %v45 = vadd.f32 %v43, 1e-05
  %v46 = vrsqrt.pop %v44
  %v47 = vmul.f32 %v46, %v44
  %v48 = vmul.f32 %v47, %v46
  %v49 = vmul.f32 0.5, %v48
  %v50 = vsub.f32 1.5, %v49
  %v51 = vmul.f32 %v46, %v50
  %vm52 = vweird.f32 %v44
  %vm53 = vweird.f32 %v46
  %vm54 = vmor %vm52, %vm53
  %v55 = vsel %vm54, %v46, %v51
  %v56 = vrsqrt.pop %v45
  %v57 = vmul.f32 %v56, %v45
  %v58 = vmul.f32 %v57, %v56
  %v59 = vmul.f32 0.5, %v58
  %v60 = vsub.f32 1.5, %v59
  %v61 = vmul.f32 %v56, %v60
  %vm62 = vweird.f32 %v45
  %vm63 = vweird.f32 %v56
  %vm64 = vmor %vm62, %vm63
  %v65 = vsel %vm64, %v56, %v61
  %v66 = vmul.f32 %v32, %v55
  %v67 = vmul.f32 %v33, %v65
  %v68 = vld [vmem:[%s1] sm:$0x1]
  %v70 = vperm.slane %v68, 0
  %v72 = vmul.f32 %v66, %v70
  %v73 = vmul.f32 %v67, %v70
  %v74 = vld [vmem:[%s2] sm:$0x1]
  %v76 = vperm.slane %v74, 0
  %v78 = vadd.f32 %v72, %v76
  %v79 = vadd.f32 %v73, %v76
  %v80 = vpack.c.bf16 %v78, %v78
  %v81 = vpack.c.bf16 %v79, %v79
  %vm82 = vcmask 257024
  %83 = vst.msk [vmem:[%s3] sm:$0xf] %vm82, %v80
  %84 = vst.msk [vmem:[%s3 + $0x4] sm:$0xf] %vm82, %v81
  // Predicated region
  $region14: #{_lambda_.9} parent=0 // pred_check
    _
  $region15: #{_lambda_.9} parent=0 // pred_check_branch
    %86 = sbr.rel (0) target = $region17
  $region16: #{_lambda_.9} parent=0 // pred_region
    _
  $region17: #{_lambda_.9} parent=0 // pred_fallthru
    _
  // Predicated region
  $region18: #{_lambda_.9} parent=0 // pred_check
    _
  $region19: #{_lambda_.9} parent=0 // pred_check_branch
    %88 = sbr.rel (0) target = $region21
  $region20: #{_lambda_.9} parent=0 // pred_region
    _
  $region21: #{_lambda_.9} parent=0 // pred_fallthru
    _

// kernel: _lambda_.12
$region0: #{_lambda_.12}
  #allocation0 [shape = 'u32[]', space=smem, size = 0x4, offset = 0x4, fixed_abs, tag = 'smem constant byte address 0x4 - core index']
  #allocation1 [shape = 'u32[72,128]{1,0:T(1,128)}', space=vmem, size = 0x9000, scoped, tag = 'internal scratch']
  %s0 = inlined_call_operand.vmem [shape: bf16[16,32], index: 0, kind: input, shape index: {}]
  %s1 = inlined_call_operand.vmem [shape: bf16[32,32], index: 1, kind: input, shape index: {}]
  %s2 = inlined_call_operand.vmem [shape: f32[1,32], index: 2, kind: input, shape index: {}]
  %s3 = inlined_call_operand.vmem [shape: bf16[16,32], index: 3, kind: input, shape index: {}]
  %s4 = inlined_call_operand.vmem [shape: f32[1,32], index: 4, kind: input, shape index: {}]
  %s5 = inlined_call_operand.vmem [shape: f32[1,32], index: 5, kind: input, shape index: {}]
  %s6 = inlined_call_operand.vmem [shape: bf16[16,32], index: 6, kind: output, shape index: {}]
  %s7 = sld [smem:[#allocation0]]
  $region34: #{_lambda_.12} parent=0
    _
  %s9 = ssub.s32 1, %s7
  %s10 = scalar_select 0, %s9, %s7
  // Predicated region
  $region2: #{_lambda_.12} parent=0 // pred_check
    _
  $region3: #{_lambda_.12} parent=0 // pred_check_branch
    %12 = sbr.rel (0) target = $region5
  $region4: #{_lambda_.12} parent=0 // pred_region
    _
  $region5: #{_lambda_.12} parent=0 // pred_fallthru
    _
  // Predicated region
  $region6: #{_lambda_.12} parent=0 // pred_check
    _
  $region7: #{_lambda_.12} parent=0 // pred_check_branch
    %14 = sbr.rel (0) target = $region9
  $region8: #{_lambda_.12} parent=0 // pred_region
    _
  $region9: #{_lambda_.12} parent=0 // pred_fallthru
    _
  // Predicated region
  $region10: #{_lambda_.12} parent=0 // pred_check
    _
  $region11: #{_lambda_.12} parent=0 // pred_check_branch
    %16 = sbr.rel (0) target = $region13
  $region12: #{_lambda_.12} parent=0 // pred_region
    _
  $region13: #{_lambda_.12} parent=0 // pred_fallthru
    _
  // Predicated region
  $region14: #{_lambda_.12} parent=0 // pred_check
    _
  $region15: #{_lambda_.12} parent=0 // pred_check_branch
    %18 = sbr.rel (0) target = $region17
  $region16: #{_lambda_.12} parent=0 // pred_region
    _
  $region17: #{_lambda_.12} parent=0 // pred_fallthru
    _
  // Predicated region
  $region18: #{_lambda_.12} parent=0 // pred_check
    _
  $region19: #{_lambda_.12} parent=0 // pred_check_branch
    %20 = sbr.rel (0) target = $region21
  $region20: #{_lambda_.12} parent=0 // pred_region
    _
  $region21: #{_lambda_.12} parent=0 // pred_fallthru
    _
  // Predicated region
  $region22: #{_lambda_.12} parent=0 // pred_check
    _
  $region23: #{_lambda_.12} parent=0 // pred_check_branch
    %22 = sbr.rel (0) target = $region25
  $region24: #{_lambda_.12} parent=0 // pred_region
    _
  $region25: #{_lambda_.12} parent=0 // pred_fallthru
    _
  %v24 = vld [vmem:[%s0] sm:$0xf]
  %v25 = vld [vmem:[%s0 + $0x4] sm:$0xf]
  %v26 = vld [vmem:[%s1] sm:$0xf]
  %v27 = vld [vmem:[%s1 + $0x4] sm:$0xf]
  %v28 = vld [vmem:[%s1 + $0x8] sm:$0xf]
  %v29 = vld [vmem:[%s1 + $0xc] sm:$0xf]
  %v30 = vld [vmem:[%s2] sm:$0x1]
  %v32 = vperm.slane %v30, 0
  %v36 = vunpack.c.l.b16 %v24
  %v37 = vunpack.c.l.b16 %v25
  %v38 = vpack.c.b16 %v37, %v36
  %v43 = vunpack.c.l.b16 %v26
  %v44 = vunpack.c.l.b16 %v27
  %v45 = vunpack.c.l.b16 %v28
  %v46 = vunpack.c.l.b16 %v29
  %v47 = vpack.c.b16 %v44, %v43
  %v48 = vpack.c.b16 %v46, %v45
  %vm51 = vcmask 261120
  %v53 = vsel %vm51, %v38, 0
  %55 = vmatpush.bf16.msra.mxu0 0
  %56 = vmatpush.bf16.msra.mxu0 0
  %57 = vmatpush.bf16.msra.mxu0 0
  %58 = vmatpush.bf16.msra.mxu0 0
  %59 = vmatpush.bf16.msra.mxu0 0
  %60 = vmatpush.bf16.msra.mxu0 0
  %61 = vmatpush.bf16.msra.mxu0 %v48
  %62 = vmatpush.bf16.msra.mxu0 %v47
  %63 = vmatmul.bf16.gmra.mxu0 %v53
  %v64 = vpop.f32.mrf.mxu0
  %v65 = vadd.f32 %v32, %v64
  %v66 = vpop.f32.mrf.mxu0
  %v67 = vadd.f32 %v32, %v66
  %68 = vdwg.mxu0
  %v69 = vld [vmem:[%s3] sm:$0xf]
  %v70 = vld [vmem:[%s3 + $0x4] sm:$0xf]
  %v71 = vunpack.c.l.bf16 %v69
  %v72 = vunpack.c.l.bf16 %v70
  %v73 = vadd.f32 %v65, %v71
  %v74 = vadd.f32 %v67, %v72
  %v75 = vsel %vm51, %v73, 0.0
  %76 = vadd.xlane.f32.xlu0 %v75
  %v77 = vpop.xlane.xlu0 %76
  %v78 = vsel %vm51, %v74, 0.0
  %79 = vadd.xlane.f32.xlu0 %v78
  %v80 = vpop.xlane.xlu0 %79
  %v81 = vrcp.pop 32.0
  %v82 = vmul.f32 32.0, %v81
  %v83 = vsub.f32 1.0, %v82
  %v84 = vmul.f32 %v81, %v83
  %v85 = vadd.f32 %v81, %v84
  %vm86 = vweird.f32 %v81
  %v87 = vsel %vm86, %v81, %v85
  %v88 = vmul.f32 %v77, %v87
  %v89 = vmul.f32 %v80, %v87
  %v90 = vsub.f32 %v73, %v88
  %v91 = vsub.f32 %v74, %v89
  %v92 = vmul.f32 %v90, %v90
  %v93 = vmul.f32 %v91, %v91
  %v94 = vsel %vm51, %v92, 0.0
  %95 = vadd.xlane.f32.xlu0 %v94
  %v96 = vpop.xlane.xlu0 %95
  %v97 = vsel %vm51, %v93, 0.0
  %98 = vadd.xlane.f32.xlu0 %v97
  %v99 = vpop.xlane.xlu0 %98
  %v100 = vmul.f32 %v96, %v87
  %v101 = vmul.f32 %v99, %v87
  %v102 = vadd.f32 %v100, 1e-05
  %v103 = vadd.f32 %v101, 1e-05
  %v104 = vrsqrt.pop %v102
  %v105 = vmul.f32 %v104, %v102
  %v106 = vmul.f32 %v105, %v104
  %v107 = vmul.f32 0.5, %v106
  %v108 = vsub.f32 1.5, %v107
  %v109 = vmul.f32 %v104, %v108
  %vm110 = vweird.f32 %v102
  %vm111 = vweird.f32 %v104
  %vm112 = vmor %vm110, %vm111
  %v113 = vsel %vm112, %v104, %v109
  %v114 = vrsqrt.pop %v103
  %v115 = vmul.f32 %v114, %v103
  %v116 = vmul.f32 %v115, %v114
  %v117 = vmul.f32 0.5, %v116
  %v118 = vsub.f32 1.5, %v117
  %v119 = vmul.f32 %v114, %v118
  %vm120 = vweird.f32 %v103
  %vm121 = vweird.f32 %v114
  %vm122 = vmor %vm120, %vm121
  %v123 = vsel %vm122, %v114, %v119
  %v124 = vmul.f32 %v90, %v113
  %v125 = vmul.f32 %v91, %v123
  %v126 = vld [vmem:[%s4] sm:$0x1]
  %v128 = vperm.slane %v126, 0
  %v130 = vmul.f32 %v124, %v128
  %v131 = vmul.f32 %v125, %v128
  %v132 = vld [vmem:[%s5] sm:$0x1]
  %v134 = vperm.slane %v132, 0
  %v136 = vadd.f32 %v130, %v134
  %v137 = vadd.f32 %v131, %v134
  %v138 = vpack.c.bf16 %v136, %v136
  %v139 = vpack.c.bf16 %v137, %v137
  %vm140 = vcmask 257024
  %141 = vst.msk [vmem:[%s6] sm:$0xf] %vm140, %v138
  %142 = vst.msk [vmem:[%s6 + $0x4] sm:$0xf] %vm140, %v139
  // Predicated region
  $region26: #{_lambda_.12} parent=0 // pred_check
    _
  $region27: #{_lambda_.12} parent=0 // pred_check_branch
    %144 = sbr.rel (0) target = $region29
  $region28: #{_lambda_.12} parent=0 // pred_region
    _
  $region29: #{_lambda_.12} parent=0 // pred_fallthru
    _
  // Predicated region
  $region30: #{_lambda_.12} parent=0 // pred_check
    _
  $region31: #{_lambda_.12} parent=0 // pred_check_branch
    %146 = sbr.rel (0) target = $region33
  $region32: #{_lambda_.12} parent=0 // pred_region
    _
  $region33: #{_lambda_.12} parent=0 // pred_fallthru
    _

// kernel: _lambda_.10
$region0: #{_lambda_.10}
  #allocation0 [shape = 'u32[]', space=smem, size = 0x4, offset = 0x4, fixed_abs, tag = 'smem constant byte address 0x4 - core index']
  #allocation1 [shape = 'u32[72,128]{1,0:T(1,128)}', space=vmem, size = 0x9000, scoped, tag = 'internal scratch']
  %s0 = inlined_call_operand.vmem [shape: bf16[16,32], index: 0, kind: input, shape index: {}]
  %s1 = inlined_call_operand.vmem [shape: bf16[3,32,32], index: 1, kind: input, shape index: {}]
  %s2 = inlined_call_operand.vmem [shape: f32[3,1,32], index: 2, kind: input, shape index: {}]
  %s3 = inlined_call_operand.vmem [shape: bf16[16,32], index: 3, kind: output, shape index: {0}]
  %s4 = inlined_call_operand.vmem [shape: bf16[16,32], index: 4, kind: output, shape index: {1}]
  %s5 = inlined_call_operand.vmem [shape: bf16[16,32], index: 5, kind: output, shape index: {2}]
  %6 = xla_tuple %s3, %s4, %s5
  %s7 = sld [smem:[#allocation0]]
  $region38: #{_lambda_.10} parent=0
    _
  %s9 = ssub.s32 1, %s7
  %s10 = scalar_select 0, %s9, %s7
  // Predicated region
  $region2: #{_lambda_.10} parent=0 // pred_check
    _
  $region3: #{_lambda_.10} parent=0 // pred_check_branch
    %12 = sbr.rel (0) target = $region5
  $region4: #{_lambda_.10} parent=0 // pred_region
    _
  $region5: #{_lambda_.10} parent=0 // pred_fallthru
    _
  // Predicated region
  $region6: #{_lambda_.10} parent=0 // pred_check
    _
  $region7: #{_lambda_.10} parent=0 // pred_check_branch
    %14 = sbr.rel (0) target = $region9
  $region8: #{_lambda_.10} parent=0 // pred_region
    _
  $region9: #{_lambda_.10} parent=0 // pred_fallthru
    _
  // Predicated region
  $region10: #{_lambda_.10} parent=0 // pred_check
    _
  $region11: #{_lambda_.10} parent=0 // pred_check_branch
    %16 = sbr.rel (0) target = $region13
  $region12: #{_lambda_.10} parent=0 // pred_region
    _
  $region13: #{_lambda_.10} parent=0 // pred_fallthru
    _
  %v18 = vld [vmem:[%s0] sm:$0xf]
  %v19 = vld [vmem:[%s0 + $0x4] sm:$0xf]
  %v20 = vld [vmem:[%s1] sm:$0xf]
  %v21 = vld [vmem:[%s1 + $0x4] sm:$0xf]
  %v22 = vld [vmem:[%s1 + $0x8] sm:$0xf]
  %v23 = vld [vmem:[%s1 + $0xc] sm:$0xf]
  %v24 = vld [vmem:[%s2] sm:$0x1]
  %v26 = vperm.slane %v24, 0
  %v30 = vunpack.c.l.b16 %v18
  %v31 = vunpack.c.l.b16 %v19
  %v32 = vpack.c.b16 %v31, %v30
  %v37 = vunpack.c.l.b16 %v20
  %v38 = vunpack.c.l.b16 %v21
  %v39 = vunpack.c.l.b16 %v22
  %v40 = vunpack.c.l.b16 %v23
  %v41 = vpack.c.b16 %v38, %v37
  %v42 = vpack.c.b16 %v40, %v39
  %vm45 = vcmask 261120
  %v47 = vsel %vm45, %v32, 0
  %49 = vmatpush.bf16.msra.mxu0 0
  %50 = vmatpush.bf16.msra.mxu0 0
  %51 = vmatpush.bf16.msra.mxu0 0
  %52 = vmatpush.bf16.msra.mxu0 0
  %53 = vmatpush.bf16.msra.mxu0 0
  %54 = vmatpush.bf16.msra.mxu0 0
  %55 = vmatpush.bf16.msra.mxu0 %v42
  %56 = vmatpush.bf16.msra.mxu0 %v41
  %57 = vmatmul.bf16.gmra.mxu0 %v47
  %v58 = vpop.f32.mrf.mxu0
  %v59 = vadd.f32 %v26, %v58
  %v60 = vpop.f32.mrf.mxu0
  %v61 = vadd.f32 %v26, %v60
  %62 = vdwg.mxu0
  %v63 = vpack.c.bf16 %v59, %v59
  %v64 = vpack.c.bf16 %v61, %v61
  %vm65 = vcmask 257024
  %66 = vst.msk [vmem:[%s3] sm:$0xf] %vm65, %v63
  %67 = vst.msk [vmem:[%s3 + $0x4] sm:$0xf] %vm65, %v64
  %s68 = scalar_lea.vmem %s1, 16
  %v69 = vld [vmem:[%s68] sm:$0xf]
  %v70 = vld [vmem:[%s68 + $0x4] sm:$0xf]
  %v71 = vld [vmem:[%s68 + $0x8] sm:$0xf]
  %v72 = vld [vmem:[%s68 + $0xc] sm:$0xf]
  %s73 = scalar_lea.vmem %s2, 1
  %v74 = vld [vmem:[%s73] sm:$0x1]
  %v76 = vperm.slane %v74, 0
  %v82 = vunpack.c.l.b16 %v69
  %v83 = vunpack.c.l.b16 %v70
  %v84 = vunpack.c.l.b16 %v71
  %v85 = vunpack.c.l.b16 %v72
  %v86 = vpack.c.b16 %v83, %v82
  %v87 = vpack.c.b16 %v85, %v84
  %90 = vmatpush.bf16.msra.mxu0 0
  %91 = vmatpush.bf16.msra.mxu0 0
  %92 = vmatpush.bf16.msra.mxu0 0
  %93 = vmatpush.bf16.msra.mxu0 0
  %94 = vmatpush.bf16.msra.mxu0 0
  %95 = vmatpush.bf16.msra.mxu0 0
  %96 = vmatpush.bf16.msra.mxu0 %v87
  %97 = vmatpush.bf16.msra.mxu0 %v86
  %98 = vmatmul.bf16.gmra.mxu0 %v47
  %v99 = vpop.f32.mrf.mxu0
  %v100 = vadd.f32 %v76, %v99
  %v101 = vpop.f32.mrf.mxu0
  %v102 = vadd.f32 %v76, %v101
  %103 = vdwg.mxu0
  %v104 = vpack.c.bf16 %v100, %v100
  %v105 = vpack.c.bf16 %v102, %v102
  %106 = vst.msk [vmem:[%s4] sm:$0xf] %vm65, %v104
  %107 = vst.msk [vmem:[%s4 + $0x4] sm:$0xf] %vm65, %v105
  %s108 = scalar_lea.vmem %s1, 32
  %v109 = vld [vmem:[%s108] sm:$0xf]
  %v110 = vld [vmem:[%s108 + $0x4] sm:$0xf]
  %v111 = vld [vmem:[%s108 + $0x8] sm:$0xf]
  %v112 = vld [vmem:[%s108 + $0xc] sm:$0xf]
  %s113 = scalar_lea.vmem %s2, 2
  %v114 = vld [vmem:[%s113] sm:$0x1]
  %v116 = vperm.slane %v114, 0
  %v122 = vunpack.c.l.b16 %v109
  %v123 = vunpack.c.l.b16 %v110
  %v124 = vunpack.c.l.b16 %v111
  %v125 = vunpack.c.l.b16 %v112
  %v126 = vpack.c.b16 %v123, %v122
  %v127 = vpack.c.b16 %v125, %v124
  %130 = vmatpush.bf16.msra.mxu0 0
  %131 = vmatpush.bf16.msra.mxu0 0
  %132 = vmatpush.bf16.msra.mxu0 0
  %133 = vmatpush.bf16.msra.mxu0 0
  %134 = vmatpush.bf16.msra.mxu0 0
  %135 = vmatpush.bf16.msra.mxu0 0
  %136 = vmatpush.bf16.msra.mxu0 %v127
  %137 = vmatpush.bf16.msra.mxu0 %v126
  %138 = vmatmul.bf16.gmra.mxu0 %v47
  %v139 = vpop.f32.mrf.mxu0
  %v140 = vadd.f32 %v116, %v139
  %v141 = vpop.f32.mrf.mxu0
  %v142 = vadd.f32 %v116, %v141
  %143 = vdwg.mxu0
  %v144 = vpack.c.bf16 %v140, %v140
  %v145 = vpack.c.bf16 %v142, %v142
  %146 = vst.msk [vmem:[%s5] sm:$0xf] %vm65, %v144
  %147 = vst.msk [vmem:[%s5 + $0x4] sm:$0xf] %vm65, %v145
  // Predicated region
  $region14: #{_lambda_.10} parent=0 // pred_check
    _
  $region15: #{_lambda_.10} parent=0 // pred_check_branch
    %149 = sbr.rel (0) target = $region17
  $region16: #{_lambda_.10} parent=0 // pred_region
    _
  $region17: #{_lambda_.10} parent=0 // pred_fallthru
    _
  // Predicated region
  $region18: #{_lambda_.10} parent=0 // pred_check
    _
  $region19: #{_lambda_.10} parent=0 // pred_check_branch
    %151 = sbr.rel (0) target = $region21
  $region20: #{_lambda_.10} parent=0 // pred_region
    _
  $region21: #{_lambda_.10} parent=0 // pred_fallthru
    _
  // Predicated region
  $region22: #{_lambda_.10} parent=0 // pred_check
    _
  $region23: #{_lambda_.10} parent=0 // pred_check_branch
    %153 = sbr.rel (0) target = $region25
  $region24: #{_lambda_.10} parent=0 // pred_region
    _
  $region25: #{_lambda_.10} parent=0 // pred_fallthru
    _
  // Predicated region
  $region26: #{_lambda_.10} parent=0 // pred_check
    _
  $region27: #{_lambda_.10} parent=0 // pred_check_branch
    %155 = sbr.rel (0) target = $region29
  $region28: #{_lambda_.10} parent=0 // pred_region
    _
  $region29: #{_lambda_.10} parent=0 // pred_fallthru
    _
  // Predicated region
  $region30: #{_lambda_.10} parent=0 // pred_check
    _
  $region31: #{_lambda_.10} parent=0 // pred_check_branch
    %157 = sbr.rel (0) target = $region33
  $region32: #{_lambda_.10} parent=0 // pred_region
    _
  $region33: #{_lambda_.10} parent=0 // pred_fallthru
    _
  // Predicated region
  $region34: #{_lambda_.10} parent=0 // pred_check
    _
  $region35: #{_lambda_.10} parent=0 // pred_check_branch
    %159 = sbr.rel (0) target = $region37
  $region36: #{_lambda_.10} parent=0 // pred_region
    _
  $region37: #{_lambda_.10} parent=0 // pred_fallthru
    _

// kernel: _lambda_.11
$region0: #{_lambda_.11}
  #allocation0 [shape = 'u32[]', space=smem, size = 0x4, offset = 0x4, fixed_abs, tag = 'smem constant byte address 0x4 - core index']
  #allocation1 [shape = 'u32[72,128]{1,0:T(1,128)}', space=vmem, size = 0x9000, scoped, tag = 'internal scratch']
  %s0 = inlined_call_operand.vmem [shape: f32[2,1,8], index: 0, kind: input, shape index: {}]
  %s1 = inlined_call_operand.vmem [shape: bf16[2,8,32], index: 1, kind: input, shape index: {}]
  %s2 = inlined_call_operand.vmem [shape: bf16[2,8,32], index: 2, kind: input, shape index: {}]
  %s3 = inlined_call_operand.vmem [shape: bf16[2,8,32], index: 3, kind: input, shape index: {}]
  %s4 = inlined_call_operand.vmem [shape: bf16[2,8,32], index: 4, kind: output, shape index: {}]
  %s5 = sld [smem:[#allocation0]]
  $region49: #{_lambda_.11} parent=0
    _
  %s7 = ssub.s32 1, %s5
  %s8 = scalar_select 0, %s7, %s5
  loop: start=0, step=1, limit=4
  $region2: #{_lambda_.11} parent=0 // loop_pre_header
    _
  $region3: #{_lambda_.11} parent=0 // loop_header
    %s10 = sphi 0, %s14
    %p11 = scmp.ge.s32.totalorder %s10, 4
    %s17 = sphi 0, %s29
    %s18 = sphi 0, %s25
    %s19 = sphi 0, %s17
    %s20 = sphi 0, %s18
    %s21 = sphi 0, %s19
    %s22 = sphi 0, %s20
    %s32 = sphi 0, %s34
    %s35 = sphi 0, %s32
    %s36 = sphi 0, %s35
    %s52 = sphi 0, %s36
    %s60 = sphi 0, %s62
    %s63 = sphi 0, %s60
    %s64 = sphi 0, %s63
    %s80 = sphi 0, %s64
    %s86 = sphi 0, %s88
    %s89 = sphi 0, %s86
    %s90 = sphi 0, %s89
    %s106 = sphi 0, %s90
    %s112 = sphi 0, %s114
    %s115 = sphi 0, %s112
    %s116 = sphi 0, %s115
    %s132 = sphi 0, %s116
    %s140 = sphi 0, %s142
    %s143 = sphi 0, %s140
    %s144 = sphi 0, %s143
    %s160 = sphi 0, %s144
  $region4: #{_lambda_.11} parent=0 // loop_header_branch
    %13 = sbr.rel (%p11) target = $region8
  $region5: #{_lambda_.11} parent=0 // loop_body
    %s15 = ssub.s32 %s10, 1
    %s16 = ssub.s32 %s10, 2
    %s23 = sadd.s32 1, %s18
    %p24 = scmp.ge.s32.totalorder %s23, 1
    %s25 = scalar_select %p24, 0, %s23
    %s26 = sadd.s32 1, %s17
    %s27 = scalar_select %p24, %s26, %s17
    %p28 = scmp.ge.s32.totalorder %s27, 2
    %s29 = scalar_select %p28, 0, %s27
    %s30 = ssub.s32 %s17, %s29
    %p31 = scmp.eq.s32.totalorder %s30, 0
    %s33 = sadd.s32 %s32, 1
    %s34 = scalar_select %p31, %s32, %s33
    %p37 = pneg %p31
    %p38 = scmp.eq.s32.totalorder %s10, 1
    %p39 = por %p37, %p38
    %p40 = scmp.ne.s32.totalorder %s32, %s35
    %p41 = scmp.eq.s32.totalorder %s10, 0
    %p42 = por %p40, %p41
    %p43 = scmp.ne.s32.totalorder %s32, %s35
    %p44 = scmp.eq.s32.totalorder %s15, 1
    %p45 = por %p43, %p44
    %p46 = scmp.ne.s32.totalorder %s35, %s36
    %p47 = scmp.eq.s32.totalorder %s15, 0
    %p48 = por %p46, %p47
    %p49 = scmp.ne.s32.totalorder %s35, %s36
    %p50 = scmp.eq.s32.totalorder %s16, 1
    %p51 = por %p49, %p50
    %p53 = scmp.ne.s32.totalorder %s36, %s52
    %p54 = scmp.eq.s32.totalorder %s16, 0
    %p55 = por %p53, %p54
    %s56 = ssub.s32 %s17, %s29
    %s57 = ssub.s32 %s18, %s25
    %s58 = sor.u32 %s56, %s57
    %p59 = scmp.eq.s32.totalorder %s58, 0
    %s61 = sadd.s32 %s60, 1
    %s62 = scalar_select %p59, %s60, %s61
    %p65 = pneg %p59
    %p66 = scmp.eq.s32.totalorder %s10, 1
    %p67 = por %p65, %p66
    %p68 = scmp.ne.s32.totalorder %s60, %s63
    %p69 = scmp.eq.s32.totalorder %s10, 0
    %p70 = por %p68, %p69
    %p71 = scmp.ne.s32.totalorder %s60, %s63
    %p72 = scmp.eq.s32.totalorder %s15, 1
    %p73 = por %p71, %p72
    %p74 = scmp.ne.s32.totalorder %s63, %s64
    %p75 = scmp.eq.s32.totalorder %s15, 0
    %p76 = por %p74, %p75
    %p77 = scmp.ne.s32.totalorder %s63, %s64
    %p78 = scmp.eq.s32.totalorder %s16, 1
    %p79 = por %p77, %p78
    %p81 = scmp.ne.s32.totalorder %s64, %s80
    %p82 = scmp.eq.s32.totalorder %s16, 0
    %p83 = por %p81, %p82
    %s84 = ssub.s32 %s17, %s29
    %p85 = scmp.eq.s32.totalorder %s84, 0
    %s87 = sadd.s32 %s86, 1
    %s88 = scalar_select %p85, %s86, %s87
    %p91 = pneg %p85
    %p92 = scmp.eq.s32.totalorder %s10, 1
    %p93 = por %p91, %p92
    %p94 = scmp.ne.s32.totalorder %s86, %s89
    %p95 = scmp.eq.s32.totalorder %s10, 0
    %p96 = por %p94, %p95
    %p97 = scmp.ne.s32.totalorder %s86, %s89
    %p98 = scmp.eq.s32.totalorder %s15, 1
    %p99 = por %p97, %p98
    %p100 = scmp.ne.s32.totalorder %s89, %s90
    %p101 = scmp.eq.s32.totalorder %s15, 0
    %p102 = por %p100, %p101
    %p103 = scmp.ne.s32.totalorder %s89, %s90
    %p104 = scmp.eq.s32.totalorder %s16, 1
    %p105 = por %p103, %p104
    %p107 = scmp.ne.s32.totalorder %s90, %s106
    %p108 = scmp.eq.s32.totalorder %s16, 0
    %p109 = por %p107, %p108
    %s110 = ssub.s32 %s17, %s29
    %p111 = scmp.eq.s32.totalorder %s110, 0
    %s113 = sadd.s32 %s112, 1
    %s114 = scalar_select %p111, %s112, %s113
    %p117 = pneg %p111
    %p118 = scmp.eq.s32.totalorder %s10, 1
    %p119 = por %p117, %p118
    %p120 = scmp.ne.s32.totalorder %s112, %s115
    %p121 = scmp.eq.s32.totalorder %s10, 0
    %p122 = por %p120, %p121
    %p123 = scmp.ne.s32.totalorder %s112, %s115
    %p124 = scmp.eq.s32.totalorder %s15, 1
    %p125 = por %p123, %p124
    %p126 = scmp.ne.s32.totalorder %s115, %s116
    %p127 = scmp.eq.s32.totalorder %s15, 0
    %p128 = por %p126, %p127
    %p129 = scmp.ne.s32.totalorder %s115, %s116
    %p130 = scmp.eq.s32.totalorder %s16, 1
    %p131 = por %p129, %p130
    %p133 = scmp.ne.s32.totalorder %s116, %s132
    %p134 = scmp.eq.s32.totalorder %s16, 0
    %p135 = por %p133, %p134
    %s136 = ssub.s32 %s17, %s29
    %s137 = ssub.s32 %s18, %s25
    %s138 = sor.u32 %s136, %s137
    %p139 = scmp.eq.s32.totalorder %s138, 0
    %s141 = sadd.s32 %s140, 1
    %s142 = scalar_select %p139, %s140, %s141
    %p145 = pneg %p139
    %p146 = scmp.eq.s32.totalorder %s10, 1
    %p147 = por %p145, %p146
    %p148 = scmp.ne.s32.totalorder %s140, %s143
    %p149 = scmp.eq.s32.totalorder %s10, 0
    %p150 = por %p148, %p149
    %p151 = scmp.ne.s32.totalorder %s140, %s143
    %p152 = scmp.eq.s32.totalorder %s15, 1
    %p153 = por %p151, %p152
    %p154 = scmp.ne.s32.totalorder %s143, %s144
    %p155 = scmp.eq.s32.totalorder %s15, 0
    %p156 = por %p154, %p155
    %p157 = scmp.ne.s32.totalorder %s143, %s144
    %p158 = scmp.eq.s32.totalorder %s16, 1
    %p159 = por %p157, %p158
    %p161 = scmp.ne.s32.totalorder %s144, %s160
    %p162 = scmp.eq.s32.totalorder %s16, 0
    %p163 = por %p161, %p162
    %p164 = scmp.le.s32.totalorder 1, %s10
    %p165 = scmp.lt.s32.totalorder %s10, 3
    %p166 = pnand %p164, %p165
    %p167 = pneg %p166
    // Predicated region
    $region9: #{_lambda_.11} parent=5 // pred_check
      _
    $region10: #{_lambda_.11} parent=5 // pred_check_branch
      %169 = sbr.rel (%p166) target = $region12
    $region11: #{_lambda_.11} parent=5 // pred_region
      %s170 = ssub.s32 %s10, 1
    $region12: #{_lambda_.11} parent=5 // pred_fallthru
      _
    %p171 = scmp.lt.s32.totalorder %s10, 2
    // Predicated region
    $region13: #{_lambda_.11} parent=5 // pred_check
      %p172 = pneg %p171
    $region14: #{_lambda_.11} parent=5 // pred_check_branch
      %174 = sbr.rel (%p172) target = $region16
    $region15: #{_lambda_.11} parent=5 // pred_region
      // Predicated region
      $region17: #{_lambda_.11} parent=15 // pred_check
        %p175 = pneg %p42
      $region18: #{_lambda_.11} parent=15 // pred_check_branch
        %177 = sbr.rel (%p175) target = $region20
      $region19: #{_lambda_.11} parent=15 // pred_region
        %p178 = scmp.lt.s32.totalorder %s17, 1
        %s179 = scalar_select %p178, %s17, 1
        %s180 = scalar_lea.vmem %s0, %s179
      $region20: #{_lambda_.11} parent=15 // pred_fallthru
        _
      // Predicated region
      $region21: #{_lambda_.11} parent=15 // pred_check
        %p181 = pneg %p70
      $region22: #{_lambda_.11} parent=15 // pred_check_branch
        %183 = sbr.rel (%p181) target = $region24
      $region23: #{_lambda_.11} parent=15 // pred_region
        %p184 = scmp.lt.s32.totalorder %s17, 1
        %s185 = scalar_select %p184, %s17, 1
        %p186 = scmp.lt.s32.totalorder %s18, 0
        %s187 = scalar_select %p186, %s18, 0
        %s188 = sadd.s32 %s187, %s185
        %s189 = smul.addr %s188, 4
        %s190 = scalar_lea.vmem %s1, %s189
      $region24: #{_lambda_.11} parent=15 // pred_fallthru
        _
      // Predicated region
      $region25: #{_lambda_.11} parent=15 // pred_check
        %p191 = pneg %p96
      $region26: #{_lambda_.11} parent=15 // pred_check_branch
        %193 = sbr.rel (%p191) target = $region28
      $region27: #{_lambda_.11} parent=15 // pred_region
        %p194 = scmp.lt.s32.totalorder %s17, 1
        %s195 = scalar_select %p194, %s17, 1
        %s196 = smul.addr %s195, 4
        %s197 = scalar_lea.vmem %s2, %s196
      $region28: #{_lambda_.11} parent=15 // pred_fallthru
        _
      // Predicated region
      $region29: #{_lambda_.11} parent=15 // pred_check
        %p198 = pneg %p122
      $region30: #{_lambda_.11} parent=15 // pred_check_branch
        %200 = sbr.rel (%p198) target = $region32
      $region31: #{_lambda_.11} parent=15 // pred_region
        %p201 = scmp.lt.s32.totalorder %s17, 1
        %s202 = scalar_select %p201, %s17, 1
        %s203 = smul.addr %s202, 4
        %s204 = scalar_lea.vmem %s3, %s203
      $region32: #{_lambda_.11} parent=15 // pred_fallthru
        _
    $region16: #{_lambda_.11} parent=5 // pred_fallthru
      _
    %p205 = scmp.le.s32.totalorder 1, %s10
    %p206 = scmp.lt.s32.totalorder %s10, 3
    %p207 = pnand %p205, %p206
    %p208 = pneg %p207
    // Predicated region
    $region33: #{_lambda_.11} parent=5 // pred_check
      _
    $region34: #{_lambda_.11} parent=5 // pred_check_branch
      %210 = sbr.rel (%p207) target = $region36
    $region35: #{_lambda_.11} parent=5 // pred_region
      %s211 = ssub.s32 %s10, 1
      %p212 = scmp.lt.s32.totalorder %s19, 1
      %s213 = scalar_select %p212, %s19, 1
      %s214 = scalar_lea.vmem %s0, %s213
      %p215 = pneg %p48
      %p216 = pneg %p45
      %p217 = scmp.lt.s32.totalorder %s19, 1
      %s218 = scalar_select %p217, %s19, 1
      %p219 = scmp.lt.s32.totalorder %s20, 0
      %s220 = scalar_select %p219, %s20, 0
      %s221 = sadd.s32 %s220, %s218
      %s222 = smul.addr %s221, 4
      %s223 = scalar_lea.vmem %s1, %s222
      %p224 = pneg %p76
      %p225 = pneg %p73
      %p226 = scmp.lt.s32.totalorder %s19, 1
      %s227 = scalar_select %p226, %s19, 1
      %s228 = smul.addr %s227, 4
      %s229 = scalar_lea.vmem %s2, %s228
      %p230 = pneg %p102
      %p231 = pneg %p99
      %p232 = scmp.lt.s32.totalorder %s19, 1
      %s233 = scalar_select %p232, %s19, 1
      %s234 = smul.addr %s233, 4
      %s235 = scalar_lea.vmem %s3, %s234
      %p236 = pneg %p128
      %p237 = pneg %p125
      %p238 = pneg %p156
      %p239 = pneg %p153
      %p240 = scmp.lt.s32.totalorder %s19, 1
      %s241 = scalar_select %p240, %s19, 1
      %p242 = scmp.lt.s32.totalorder %s20, 0
      %s243 = scalar_select %p242, %s20, 0
      %s244 = sadd.s32 %s243, %s241
      %s245 = smul.addr %s244, 4
      %s246 = scalar_lea.vmem %s4, %s245
      %p247 = scmp.lt.s32.totalorder %s19, 1
      %s248 = scalar_select %p247, %s19, 1
      %s249 = scalar_lea.vmem %s0, %s248
      %p250 = scmp.lt.s32.totalorder %s19, 1
      %s251 = scalar_select %p250, %s19, 1
      %p252 = scmp.lt.s32.totalorder %s20, 0
      %s253 = scalar_select %p252, %s20, 0
      %s254 = sadd.s32 %s253, %s251
      %s255 = smul.addr %s254, 4
      %s256 = scalar_lea.vmem %s1, %s255
      %p257 = scmp.lt.s32.totalorder %s19, 1
      %s258 = scalar_select %p257, %s19, 1
      %s259 = smul.addr %s258, 4
      %s260 = scalar_lea.vmem %s2, %s259
      %p261 = scmp.lt.s32.totalorder %s19, 1
      %s262 = scalar_select %p261, %s19, 1
      %s263 = smul.addr %s262, 4
      %s264 = scalar_lea.vmem %s3, %s263
      %p265 = scmp.lt.s32.totalorder %s19, 1
      %s266 = scalar_select %p265, %s19, 1
      %p267 = scmp.lt.s32.totalorder %s20, 0
      %s268 = scalar_select %p267, %s20, 0
      %s269 = sadd.s32 %s268, %s266
      %s270 = smul.addr %s269, 4
      %s271 = scalar_lea.vmem %s4, %s270
      %v273 = vld [vmem:[%s249] sm:$0x1]
      %v274 = vld [vmem:[%s256] sm:$0xf]
      %v275 = vld [vmem:[%s260] sm:$0xf]
      %v276 = vld [vmem:[%s264] sm:$0xf]
      %vm277 = vcmask 130048
      %v279 = vsel %vm277, %v274, 0
      %v282 = vsel %vm277, %v275, 0
      %284 = vmatpush.bf16.xpose.msra.mxu0 0
      %285 = vmatpush.bf16.xpose.msra.mxu0 0
      %286 = vmatpush.bf16.xpose.msra.mxu0 0
      %287 = vmatpush.bf16.xpose.msra.mxu0 0
      %288 = vmatpush.bf16.xpose.msra.mxu0 0
      %289 = vmatpush.bf16.xpose.msra.mxu0 0
      %290 = vmatpush.bf16.xpose.msra.mxu0 0
      %291 = vmatpush.bf16.xpose.msra.mxu0 %v282
      %292 = vmatmul.bf16.gmra.mxu0 %v279
      %v293 = vpop.f32.mrf.mxu0
      %v294 = vadd.f32 0.0, %v293
      %v295 = vpop.f32.mrf.mxu0
      %296 = vdwg.mxu0
      %v297 = vmul.f32 %v294, 0.25
      %v299 = vperm.slane %v273, 0
      %v301 = vadd.f32 %v297, %v299
      %vm302 = vcmask 64512
      %v303 = vsel %vm302, %v301, -inf
      %304 = vmax.xlane.f32.xlu0 %v303
      %v305 = vpop.xlane.xlu0 %304
      %v306 = vsub.f32 %v301, %v305
      %v307 = vmul.f32 %v306, 1.442695
      %v308 = vpow.pop %v307
      %v309 = vsel %vm302, %v308, 0.0
      %310 = vadd.xlane.f32.xlu0 %v309
      %v311 = vpop.xlane.xlu0 %310
      %v312 = vrcp.pop %v311
      %v313 = vpack.c.bf16 %v308, %v308
      %v315 = vsel %vm302, %v313, 0
      %vm317 = vcmask 1043456
      %v319 = vsel %vm317, %v276, 0
      %321 = vmatpush.bf16.msra.mxu0 0
      %322 = vmatpush.bf16.msra.mxu0 0
      %323 = vmatpush.bf16.msra.mxu0 0
      %324 = vmatpush.bf16.msra.mxu0 0
      %325 = vmatpush.bf16.msra.mxu0 0
      %326 = vmatpush.bf16.msra.mxu0 0
      %327 = vmatpush.bf16.msra.mxu0 0
      %328 = vmatpush.bf16.msra.mxu0 %v319
      %329 = vmatmul.bf16.gmra.mxu0 %v315
      %v330 = vpop.f32.mrf.mxu0
      %v331 = vadd.f32 0.0, %v330
      %v332 = vpop.f32.mrf.mxu0
      %333 = vdwg.mxu0
      %v334 = vmul.f32 %v331, %v312
      %v336 = vunpack.c.l.b16 %v274
      %v337 = vpack.c.b16 %v336, %v336
      %338 = vrot.lane.b32.xlu0 %v337, 112
      %v339 = vpop.permute.xlu0 %338
      %v341 = vunpack.c.l.b16 %v275
      %v342 = vpack.c.b16 %v341, %v341
      %343 = vrot.lane.b32.xlu0 %v342, 112
      %v344 = vpop.permute.xlu0 %343
      %v346 = vsel %vm277, %v339, 0
      %v349 = vsel %vm277, %v344, 0
      %351 = vmatpush.bf16.xpose.msra.mxu0 0
      %352 = vmatpush.bf16.xpose.msra.mxu0 0
      %353 = vmatpush.bf16.xpose.msra.mxu0 0
      %354 = vmatpush.bf16.xpose.msra.mxu0 0
      %355 = vmatpush.bf16.xpose.msra.mxu0 0
      %356 = vmatpush.bf16.xpose.msra.mxu0 0
      %357 = vmatpush.bf16.xpose.msra.mxu0 0
      %358 = vmatpush.bf16.xpose.msra.mxu0 %v349
      %359 = vmatmul.bf16.gmra.mxu0 %v346
      %v360 = vpop.f32.mrf.mxu0
      %v361 = vadd.f32 0.0, %v360
      %v362 = vpop.f32.mrf.mxu0
      %363 = vdwg.mxu0
      %v364 = vmul.f32 %v361, 0.25
      %v365 = vadd.f32 %v364, %v299
      %v366 = vsel %vm302, %v365, -inf
      %367 = vmax.xlane.f32.xlu0 %v366
      %v368 = vpop.xlane.xlu0 %367
      %v369 = vsub.f32 %v365, %v368
      %v370 = vmul.f32 %v369, 1.442695
      %v371 = vpow.pop %v370
      %v372 = vsel %vm302, %v371, 0.0
      %373 = vadd.xlane.f32.xlu0 %v372
      %v374 = vpop.xlane.xlu0 %373
      %v375 = vrcp.pop %v374
      %v376 = vpack.c.bf16 %v371, %v371
      %v378 = vunpack.c.l.b16 %v276
      %v379 = vpack.c.b16 %v378, %v378
      %380 = vrot.lane.b32.xlu0 %v379, 112
      %v381 = vpop.permute.xlu0 %380
      %v383 = vsel %vm302, %v376, 0
      %v386 = vsel %vm317, %v381, 0
      %388 = vmatpush.bf16.msra.mxu0 0
      %389 = vmatpush.bf16.msra.mxu0 0
      %390 = vmatpush.bf16.msra.mxu0 0
      %391 = vmatpush.bf16.msra.mxu0 0
      %392 = vmatpush.bf16.msra.mxu0 0
      %393 = vmatpush.bf16.msra.mxu0 0
      %394 = vmatpush.bf16.msra.mxu0 0
      %395 = vmatpush.bf16.msra.mxu0 %v386
      %396 = vmatmul.bf16.gmra.mxu0 %v383
      %v397 = vpop.f32.mrf.mxu0
      %v398 = vadd.f32 0.0, %v397
      %v399 = vpop.f32.mrf.mxu0
      %400 = vdwg.mxu0
      %v401 = vmul.f32 %v398, %v375
      %403 = vrot.lane.b32.xlu0 %v401, 16
      %v404 = vpop.permute.xlu0 %403
      %v406 = vsel %vm277, %v334, %v404
      %v407 = vpack.c.bf16 %v406, %v406
      %vm408 = vcmask 257024
      %409 = vst.msk [vmem:[%s271] sm:$0xf] %vm408, %v407
      %p410 = scmp.lt.s32.totalorder %s19, 1
      %s411 = scalar_select %p410, %s19, 1
      %p412 = scmp.lt.s32.totalorder %s20, 0
      %s413 = scalar_select %p412, %s20, 0
      %s414 = sadd.s32 %s413, %s411
      %s415 = smul.addr %s414, 4
      %s416 = scalar_lea.vmem %s4, %s415
      // Predicated region
      $region37: #{_lambda_.11} parent=35 // pred_check
        %p417 = pneg %p153
      $region38: #{_lambda_.11} parent=35 // pred_check_branch
        %419 = sbr.rel (%p417) target = $region40
      $region39: #{_lambda_.11} parent=35 // pred_region
        _
      $region40: #{_lambda_.11} parent=35 // pred_fallthru
        _
    $region36: #{_lambda_.11} parent=5 // pred_fallthru
      _
    %p420 = scmp.le.s32.totalorder 2, %s10
    // Predicated region
    $region41: #{_lambda_.11} parent=5 // pred_check
      %p421 = pneg %p420
    $region42: #{_lambda_.11} parent=5 // pred_check_branch
      %423 = sbr.rel (%p421) target = $region44
    $region43: #{_lambda_.11} parent=5 // pred_region
      %s424 = ssub.s32 %s10, 2
      // Predicated region
      $region45: #{_lambda_.11} parent=43 // pred_check
        %p425 = pneg %p159
      $region46: #{_lambda_.11} parent=43 // pred_check_branch
        %427 = sbr.rel (%p425) target = $region48
      $region47: #{_lambda_.11} parent=43 // pred_region
        %p428 = scmp.lt.s32.totalorder %s21, 1
        %s429 = scalar_select %p428, %s21, 1
        %p430 = scmp.lt.s32.totalorder %s22, 0
        %s431 = scalar_select %p430, %s22, 0
        %s432 = sadd.s32 %s431, %s429
        %s433 = smul.addr %s432, 4
        %s434 = scalar_lea.vmem %s4, %s433
      $region48: #{_lambda_.11} parent=43 // pred_fallthru
        _
    $region44: #{_lambda_.11} parent=5 // pred_fallthru
      _
  $region6: #{_lambda_.11} parent=0 // loop_footer
    %s14 = sadd.s32 1, %s10
  $region7: #{_lambda_.11} parent=0 // loop_footer_branch
    %9 = sbr.rel target = $region3
  $region8: #{_lambda_.11} parent=0 // loop_exit
    _

// kernel: _lambda_.13
$region0: #{_lambda_.13}
  #allocation0 [shape = 'u32[]', space=smem, size = 0x4, offset = 0x4, fixed_abs, tag = 'smem constant byte address 0x4 - core index']
  #allocation1 [shape = 'u32[72,128]{1,0:T(1,128)}', space=vmem, size = 0x9000, scoped, tag = 'internal scratch']
  %s0 = inlined_call_operand.vmem [shape: bf16[16,32], index: 0, kind: input, shape index: {}]
  %s1 = inlined_call_operand.vmem [shape: bf16[32,64], index: 1, kind: input, shape index: {}]
  %s2 = inlined_call_operand.vmem [shape: f32[1,64], index: 2, kind: input, shape index: {}]
  %s3 = inlined_call_operand.vmem [shape: bf16[64,32], index: 3, kind: input, shape index: {}]
  %s4 = inlined_call_operand.vmem [shape: f32[1,32], index: 4, kind: input, shape index: {}]
  %s5 = inlined_call_operand.vmem [shape: f32[1,32], index: 5, kind: input, shape index: {}]
  %s6 = inlined_call_operand.vmem [shape: f32[1,32], index: 6, kind: input, shape index: {}]
  %s7 = inlined_call_operand.vmem [shape: bf16[16,32], index: 7, kind: output, shape index: {}]
  %s8 = sld [smem:[#allocation0]]
  $region38: #{_lambda_.13} parent=0
    _
  %s10 = ssub.s32 1, %s8
  %s11 = scalar_select 0, %s10, %s8
  // Predicated region
  $region2: #{_lambda_.13} parent=0 // pred_check
    _
  $region3: #{_lambda_.13} parent=0 // pred_check_branch
    %13 = sbr.rel (0) target = $region5
  $region4: #{_lambda_.13} parent=0 // pred_region
    _
  $region5: #{_lambda_.13} parent=0 // pred_fallthru
    _
  // Predicated region
  $region6: #{_lambda_.13} parent=0 // pred_check
    _
  $region7: #{_lambda_.13} parent=0 // pred_check_branch
    %15 = sbr.rel (0) target = $region9
  $region8: #{_lambda_.13} parent=0 // pred_region
    _
  $region9: #{_lambda_.13} parent=0 // pred_fallthru
    _
  // Predicated region
  $region10: #{_lambda_.13} parent=0 // pred_check
    _
  $region11: #{_lambda_.13} parent=0 // pred_check_branch
    %17 = sbr.rel (0) target = $region13
  $region12: #{_lambda_.13} parent=0 // pred_region
    _
  $region13: #{_lambda_.13} parent=0 // pred_fallthru
    _
  // Predicated region
  $region14: #{_lambda_.13} parent=0 // pred_check
    _
  $region15: #{_lambda_.13} parent=0 // pred_check_branch
    %19 = sbr.rel (0) target = $region17
  $region16: #{_lambda_.13} parent=0 // pred_region
    _
  $region17: #{_lambda_.13} parent=0 // pred_fallthru
    _
  // Predicated region
  $region18: #{_lambda_.13} parent=0 // pred_check
    _
  $region19: #{_lambda_.13} parent=0 // pred_check_branch
    %21 = sbr.rel (0) target = $region21
  $region20: #{_lambda_.13} parent=0 // pred_region
    _
  $region21: #{_lambda_.13} parent=0 // pred_fallthru
    _
  // Predicated region
  $region22: #{_lambda_.13} parent=0 // pred_check
    _
  $region23: #{_lambda_.13} parent=0 // pred_check_branch
    %23 = sbr.rel (0) target = $region25
  $region24: #{_lambda_.13} parent=0 // pred_region
    _
  $region25: #{_lambda_.13} parent=0 // pred_fallthru
    _
  // Predicated region
  $region26: #{_lambda_.13} parent=0 // pred_check
    _
  $region27: #{_lambda_.13} parent=0 // pred_check_branch
    %25 = sbr.rel (0) target = $region29
  $region28: #{_lambda_.13} parent=0 // pred_region
    _
  $region29: #{_lambda_.13} parent=0 // pred_fallthru
    _
  %v27 = vld [vmem:[%s0] sm:$0xf]
  %v28 = vld [vmem:[%s0 + $0x4] sm:$0xf]
  %v29 = vld [vmem:[%s1] sm:$0xf]
  %v30 = vld [vmem:[%s1 + $0x4] sm:$0xf]
  %v31 = vld [vmem:[%s1 + $0x8] sm:$0xf]
  %v32 = vld [vmem:[%s1 + $0xc] sm:$0xf]
  %v33 = vld [vmem:[%s2] sm:$0x1]
  %v35 = vperm.slane %v33, 0
  %v39 = vunpack.c.l.b16 %v27
  %v40 = vunpack.c.l.b16 %v28
  %v41 = vpack.c.b16 %v40, %v39
  %v46 = vunpack.c.l.b16 %v29
  %v47 = vunpack.c.l.b16 %v30
  %v48 = vunpack.c.l.b16 %v31
  %v49 = vunpack.c.l.b16 %v32
  %v50 = vpack.c.b16 %v47, %v46
  %v51 = vpack.c.b16 %v49, %v48
  %vm54 = vcmask 261120
  %v56 = vsel %vm54, %v41, 0
  %58 = vmatpush.bf16.msra.mxu0 0
  %59 = vmatpush.bf16.msra.mxu0 0
  %60 = vmatpush.bf16.msra.mxu0 0
  %61 = vmatpush.bf16.msra.mxu0 0
  %62 = vmatpush.bf16.msra.mxu0 0
  %63 = vmatpush.bf16.msra.mxu0 0
  %64 = vmatpush.bf16.msra.mxu0 %v51
  %65 = vmatpush.bf16.msra.mxu0 %v50
  %66 = vmatmul.bf16.gmra.mxu0 %v56
  %v67 = vpop.f32.mrf.mxu0
  %v68 = vadd.f32 %v35, %v67
  %v69 = vpop.f32.mrf.mxu0
  %v70 = vadd.f32 %v35, %v69
  %71 = vdwg.mxu0
  %v72 = vmul.f32 %v68, 0.5
  %v73 = vmul.f32 %v70, 0.5
  %v74 = vmul.f32 %v68, 0.044715
  %v75 = vmul.f32 %v70, 0.044715
  %v76 = vmul.f32 %v74, %v68
  %v77 = vmul.f32 %v75, %v70
  %v78 = vmul.f32 %v76, %v68
  %v79 = vmul.f32 %v77, %v70
  %v80 = vadd.f32 %v68, %v78
  %v81 = vadd.f32 %v70, %v79
  %v82 = vmul.f32 %v80, 0.7978846
  %v83 = vmul.f32 %v81, 0.7978846
  %v84 = vtanh.pop %v82
  %v85 = vtanh.pop %v83
  %v86 = vadd.f32 %v84, 1.0
  %v87 = vadd.f32 %v85, 1.0
  %v88 = vmul.f32 %v72, %v86
  %v89 = vmul.f32 %v73, %v87
  %v90 = vpack.c.bf16 %v89, %v88
  %v91 = vld [vmem:[%s3] sm:$0xf]
  %v92 = vld [vmem:[%s3 + $0x4] sm:$0xf]
  %v93 = vld [vmem:[%s3 + $0x8] sm:$0xf]
  %v94 = vld [vmem:[%s3 + $0xc] sm:$0xf]
  %v95 = vld [vmem:[%s3 + $0x10] sm:$0xf]
  %v96 = vld [vmem:[%s3 + $0x14] sm:$0xf]
  %v97 = vld [vmem:[%s3 + $0x18] sm:$0xf]
  %v98 = vld [vmem:[%s3 + $0x1c] sm:$0xf]
  %v99 = vld [vmem:[%s4] sm:$0x1]
  %v101 = vperm.slane %v99, 0
  %v111 = vunpack.c.l.b16 %v91
  %v112 = vunpack.c.l.b16 %v92
  %v113 = vunpack.c.l.b16 %v93
  %v114 = vunpack.c.l.b16 %v94
  %v115 = vunpack.c.l.b16 %v95
  %v116 = vunpack.c.l.b16 %v96
  %v117 = vunpack.c.l.b16 %v97
  %v118 = vunpack.c.l.b16 %v98
  %v119 = vpack.c.b16 %v112, %v111
  %v120 = vpack.c.b16 %v114, %v113
  %v121 = vpack.c.b16 %v116, %v115
  %v122 = vpack.c.b16 %v118, %v117
  %vm127 = vcmask 523264
  %v129 = vsel %vm127, %v90, 0
  %131 = vmatpush.bf16.msra.mxu0 0
  %132 = vmatpush.bf16.msra.mxu0 0
  %133 = vmatpush.bf16.msra.mxu0 0
  %134 = vmatpush.bf16.msra.mxu0 0
  %135 = vmatpush.bf16.msra.mxu0 %v122
  %136 = vmatpush.bf16.msra.mxu0 %v121
  %137 = vmatpush.bf16.msra.mxu0 %v120
  %138 = vmatpush.bf16.msra.mxu0 %v119
  %139 = vmatmul.bf16.gmra.mxu0 %v129
  %v140 = vpop.f32.mrf.mxu0
  %v141 = vadd.f32 %v101, %v140
  %v142 = vpop.f32.mrf.mxu0
  %v143 = vadd.f32 %v101, %v142
  %144 = vdwg.mxu0
  %v145 = vunpack.c.l.bf16 %v27
  %v146 = vunpack.c.l.bf16 %v28
  %v147 = vadd.f32 %v141, %v145
  %v148 = vadd.f32 %v143, %v146
  %v149 = vsel %vm54, %v147, 0.0
  %150 = vadd.xlane.f32.xlu0 %v149
  %v151 = vpop.xlane.xlu0 %150
  %v152 = vsel %vm54, %v148, 0.0
  %153 = vadd.xlane.f32.xlu0 %v152
  %v154 = vpop.xlane.xlu0 %153
  %v155 = vrcp.pop 32.0
  %v156 = vmul.f32 32.0, %v155
  %v157 = vsub.f32 1.0, %v156
  %v158 = vmul.f32 %v155, %v157
  %v159 = vadd.f32 %v155, %v158
  %vm160 = vweird.f32 %v155
  %v161 = vsel %vm160, %v155, %v159
  %v162 = vmul.f32 %v151, %v161
  %v163 = vmul.f32 %v154, %v161
  %v164 = vsub.f32 %v147, %v162
  %v165 = vsub.f32 %v148, %v163
  %v166 = vmul.f32 %v164, %v164
  %v167 = vmul.f32 %v165, %v165
  %v168 = vsel %vm54, %v166, 0.0
  %169 = vadd.xlane.f32.xlu0 %v168
  %v170 = vpop.xlane.xlu0 %169
  %v171 = vsel %vm54, %v167, 0.0
  %172 = vadd.xlane.f32.xlu0 %v171
  %v173 = vpop.xlane.xlu0 %172
  %v174 = vmul.f32 %v170, %v161
  %v175 = vmul.f32 %v173, %v161
  %v176 = vadd.f32 %v174, 1e-05
  %v177 = vadd.f32 %v175, 1e-05
  %v178 = vrsqrt.pop %v176
  %v179 = vmul.f32 %v178, %v176
  %v180 = vmul.f32 %v179, %v178
  %v181 = vmul.f32 0.5, %v180
  %v182 = vsub.f32 1.5, %v181
  %v183 = vmul.f32 %v178, %v182
  %vm184 = vweird.f32 %v176
  %vm185 = vweird.f32 %v178
  %vm186 = vmor %vm184, %vm185
  %v187 = vsel %vm186, %v178, %v183
  %v188 = vrsqrt.pop %v177
  %v189 = vmul.f32 %v188, %v177
  %v190 = vmul.f32 %v189, %v188
  %v191 = vmul.f32 0.5, %v190
  %v192 = vsub.f32 1.5, %v191
  %v193 = vmul.f32 %v188, %v192
  %vm194 = vweird.f32 %v177
  %vm195 = vweird.f32 %v188
  %vm196 = vmor %vm194, %vm195
  %v197 = vsel %vm196, %v188, %v193
  %v198 = vmul.f32 %v164, %v187
  %v199 = vmul.f32 %v165, %v197
  %v200 = vld [vmem:[%s5] sm:$0x1]
  %v202 = vperm.slane %v200, 0
  %v204 = vmul.f32 %v198, %v202
  %v205 = vmul.f32 %v199, %v202
  %v206 = vld [vmem:[%s6] sm:$0x1]
  %v208 = vperm.slane %v206, 0
  %v210 = vadd.f32 %v204, %v208
  %v211 = vadd.f32 %v205, %v208
  %v212 = vpack.c.bf16 %v210, %v210
  %v213 = vpack.c.bf16 %v211, %v211
  %vm214 = vcmask 257024
  %215 = vst.msk [vmem:[%s7] sm:$0xf] %vm214, %v212
  %216 = vst.msk [vmem:[%s7 + $0x4] sm:$0xf] %vm214, %v213
  // Predicated region
  $region30: #{_lambda_.13} parent=0 // pred_check
    _
  $region31: #{_lambda_.13} parent=0 // pred_check_branch
    %218 = sbr.rel (0) target = $region33
  $region32: #{_lambda_.13} parent=0 // pred_region
    _
  $region33: #{_lambda_.13} parent=0 // pred_fallthru
    _
  // Predicated region
  $region34: #{_lambda_.13} parent=0 // pred_check
    _
  $region35: #{_lambda_.13} parent=0 // pred_check_branch
    %220 = sbr.rel (0) target = $region37
  $region36: #{_lambda_.13} parent=0 // pred_region
    _
  $region37: #{_lambda_.13} parent=0 // pred_fallthru
    _

</llo_original>
